<compile_context>
chip_gen: v6e
topology: v6e:2x2x1
jax: 0.10.0
libtpu: 0.0.40
codegen_flags: <defaults>
</compile_context>

<pallas_src>
import functools

import jax
import jax.numpy as jnp
from jax.experimental import pallas as pl
from jax.experimental.pallas import tpu as pltpu

_LANE = 128      # vreg lane width (last dim)
_SUBLANE = 8     # f32 sublane count (second-to-last dim)


def _round_up(x, m):
    return (x + m - 1) // m * m


def _pick_batch_tile(B):
    """Batch (M) tile: large enough to fill MXU rows (>=128; 256-multiples for
    v6e/v7x's 2x256x256 MXU), small enough that there are >= 2 grid steps so the
    'parallel' batch axis gives v7x's second TensorCore work.  Floor of 8 (one
    f32 sublane) for tiny batches like the demo."""
    if B >= 1024:
        return 512
    if B >= 512:
        return 256
    if B >= 256:
        return 128
    if B >= 16:
        return max(_SUBLANE, _round_up(pl.cdiv(B, 2), _SUBLANE))
    return _SUBLANE


def _fused_mlp_kernel(num_layers, x_ref, *refs):
    """Push one batch tile through all layers; activations never leave VMEM/vregs.

    refs = [w_0, shift_0, w_1, shift_1, ..., w_{L-1}, shift_{L-1}, out]
      w_i     : [Din_pad_i, Dout_pad_i]  compute dtype (bias + eval-BN scale folded in)
      shift_i : [1, Dout_pad_i]          f32 (folded bias*scale + BN shift)
    """
    param_refs = refs[: 2 * num_layers]
    o_ref = refs[2 * num_layers]

    h = x_ref[...]  # already compute dtype (bf16): no in-kernel cast for layer 0
    for li in range(num_layers):
        w_ref = param_refs[2 * li]
        s_ref = param_refs[2 * li + 1]
        # MXU matmul in compute dtype (bf16 x bf16), f32 accumulation.
        acc = jnp.dot(h, w_ref[...], preferred_element_type=jnp.float32)
        y = acc + s_ref[...]                 # folded Linear bias + eval BN (f32 VPU epilogue)
        if li < num_layers - 1:
            y = jnp.maximum(y, 0.0)          # ReLU; last block has activation='none'
            h = y.astype(w_ref.dtype)        # back to compute dtype for the next MXU pass
        else:
            h = y
        # Dropout: identity in eval mode.
    o_ref[...] = h.astype(o_ref.dtype)


@functools.partial(jax.jit, static_argnames=("batch_tile", "out_dim", "use_buffered"))
def _mlp_forward_impl(ws, ss, x, *, batch_tile, out_dim, use_buffered):
    B = x.shape[0]
    num_layers = len(ws)
    cdt = ws[0].dtype
    Din_pad = ws[0].shape[0]
    Dout_pad = ws[-1].shape[1]

    # Flatten (== torch x.view(B, -1)) and cast to compute dtype so the x DMA
    # and its double buffer are half-width; the first matmul casts anyway.
    h = x.reshape(B, -1).astype(cdt)
    Din = h.shape[1]

    # Pad batch to a tile multiple and features to the lane-padded width the
    # folded weights expect.  Under jit this fuses, and it is a no-op when the
    # shapes are already aligned (e.g. Din = 1024 is a 128-multiple).
    B_pad = _round_up(max(B, batch_tile), batch_tile)
    pad_r, pad_c = B_pad - B, Din_pad - Din
    if pad_r or pad_c:
        h = jnp.pad(h, ((0, pad_r), (0, pad_c)))

    flat_params = []
    in_specs = [pl.BlockSpec((batch_tile, Din_pad), lambda i: (i, 0))]
    # Parameters never change across grid steps (index_map == (0, 0)): request
    # single buffering so they are DMAed once and don't hold a second VMEM copy.
    pmode = pl.Buffered(1) if use_buffered else None
    for w, s in zip(ws, ss):
        flat_params += [w, s]
        if pmode is not None:
            in_specs += [
                pl.BlockSpec(w.shape, lambda i: (0, 0), pipeline_mode=pmode),
                pl.BlockSpec(s.shape, lambda i: (0, 0), pipeline_mode=pmode),
            ]
        else:
            in_specs += [
                pl.BlockSpec(w.shape, lambda i: (0, 0)),
                pl.BlockSpec(s.shape, lambda i: (0, 0)),
            ]

    # Explicit VMEM budget: params (x buffer count) + double-buffered x / out
    # blocks + headroom for live f32 intermediates; clamp to <= 32 MiB which is
    # within the default scoped limits of v5e (16/128), v6e (32/128), v7x (32/64).
    itemsize = jnp.dtype(cdt).itemsize
    param_bytes = sum(int(a.size) * a.dtype.itemsize for a in flat_params)
    x_block_bytes = batch_tile * Din_pad * itemsize
    out_block_bytes = batch_tile * Dout_pad * 4
    max_dim_pad = max(max(w.shape) for w in ws)
    need = ((1 if use_buffered else 2) * param_bytes
            + 2 * x_block_bytes + 2 * out_block_bytes
            + 4 * batch_tile * max_dim_pad * 4)
    vmem_limit = int(min(max(2 * need, 8 << 20), 32 << 20))

    kernel = functools.partial(_fused_mlp_kernel, num_layers)
    out_pad = pl.pallas_call(
        kernel,
        out_shape=jax.ShapeDtypeStruct((B_pad, Dout_pad), jnp.float32),
        grid=(pl.cdiv(B_pad, batch_tile),),
        in_specs=in_specs,
        out_specs=pl.BlockSpec((batch_tile, Dout_pad), lambda i: (i, 0)),
        compiler_params=pltpu.CompilerParams(
            # Batch tiles are independent -> shard across TensorCores (v7x).
            dimension_semantics=("parallel",),
            vmem_limit_bytes=vmem_limit,
        ),
    )(h, *flat_params)

    return out_pad[:B, :out_dim]


def mlp_forward(params, x, *, batch_tile=None):
    """x: [B, C, H, W] (NCHW). Returns [B, output_size] (f32)."""
    ws = tuple(p["w_folded"] for p in params)
    ss = tuple(p["shift_folded"] for p in params)
    out_dim = params[-1]["out_dim"]
    if batch_tile is None:
        batch_tile = _pick_batch_tile(x.shape[0])
    try:
        return _mlp_forward_impl(ws, ss, x, batch_tile=batch_tile,
                                 out_dim=out_dim, use_buffered=True)
    except Exception:
        # TODO(synk): pipeline_mode=pl.Buffered(1) not accepted by this
        # jax/libtpu build; fall back to default double-buffered parameters.
        return _mlp_forward_impl(ws, ss, x, batch_tile=batch_tile,
                                 out_dim=out_dim, use_buffered=False)


def init_mlp_params(key, input_size, output_size, hidden_size, num_blocks,
                    compute_dtype=jnp.bfloat16):
    """Deterministic synthetic parameters; bias + eval-BN folded & padded offline."""
    dims = [input_size] + [hidden_size] * (num_blocks - 1) + [output_size]
    dims_pad = [_round_up(d, _LANE) for d in dims]
    eps = 1e-5
    params = []
    for li in range(num_blocks):
        din, dout = dims[li], dims[li + 1]
        din_p, dout_p = dims_pad[li], dims_pad[li + 1]
        key, kw, kb, kg, kbe, km, kv = jax.random.split(key, 7)
        w = jax.random.normal(kw, (din, dout), jnp.float32) / jnp.sqrt(din)
        b = jax.random.normal(kb, (1, dout), jnp.float32) * 0.1
        gamma = 1.0 + 0.1 * jax.random.normal(kg, (1, dout), jnp.float32)
        beta = 0.1 * jax.random.normal(kbe, (1, dout), jnp.float32)
        r_mean = 0.1 * jax.random.normal(km, (1, dout), jnp.float32)
        r_var = jax.random.uniform(kv, (1, dout), jnp.float32, minval=0.5, maxval=1.5)

        # Eval-mode BatchNorm1d as per-feature affine.
        scale = gamma / jnp.sqrt(r_var + eps)      # [1, dout]
        shift = beta - r_mean * scale              # [1, dout]

        # Offline fold: (x@W + b)*scale + shift == x@(W*scale) + (b*scale + shift).
        w_folded = w * scale
        shift_folded = b * scale + shift

        # Zero-pad to lane-dense shapes (multiples of 128).  Padded output
        # columns carry zero weight & zero shift, so padded lanes stay exact
        # zeros through every layer (ReLU(0)=0) and never corrupt real lanes.
        w_pad = jnp.zeros((din_p, dout_p), jnp.float32).at[:din, :dout].set(w_folded)
        s_pad = jnp.zeros((1, dout_p), jnp.float32).at[:, :dout].set(shift_folded)

        params.append(dict(
            # unfolded params, kept only for the pure-JAX reference
            w=w, b=b, scale=scale, shift=shift,
            # kernel params: folded, padded, weights in compute dtype
            w_folded=w_pad.astype(compute_dtype),
            shift_folded=s_pad,
            in_dim=din, out_dim=dout,
        ))
    return params


def mlp_reference(params, x):
    """Pure-JAX f32 reference (unfolded math) for correctness checking."""
    B = x.shape[0]
    h = x.reshape(B, -1).astype(jnp.float32)
    n = len(params)
    for li, p in enumerate(params):
        y = h @ p["w"] + p["b"]
        y = y * p["scale"] + p["shift"]
        if li < n - 1:
            y = jnp.maximum(y, 0.0)
        h = y
    return h


if __name__ == "__main__":
    key = jax.random.PRNGKey(0)
    kx, kp, kx2 = jax.random.split(key, 3)

    # Small shapes consistent with MLP(input_size, output_size, hidden_size, num_blocks)
    B, C, H, W = 2, 4, 16, 16
    input_size = C * H * W            # 1024 (x.view(B, -1))
    hidden_size = 32
    output_size = 16
    num_blocks = 3

    x = jax.random.normal(kx, (B, C, H, W), jnp.float32)
    params = init_mlp_params(kp, input_size, output_size, hidden_size, num_blocks)

    out = jax.block_until_ready(mlp_forward(params, x))
    ref = mlp_reference(params, x)
    assert out.shape == (B, output_size)
    rel_err = jnp.max(jnp.abs(out - ref)) / (jnp.max(jnp.abs(ref)) + 1e-6)
    assert rel_err < 3e-2, f"mismatch vs reference (B=2): rel err {rel_err}"

    # Larger batch exercises the multi-step 'parallel' grid path (>= 2 tiles).
    B2 = 64
    x2 = jax.random.normal(kx2, (B2, C, H, W), jnp.float32)
    out2 = jax.block_until_ready(mlp_forward(params, x2))
    ref2 = mlp_reference(params, x2)
    assert out2.shape == (B2, output_size)
    rel_err2 = jnp.max(jnp.abs(out2 - ref2)) / (jnp.max(jnp.abs(ref2)) + 1e-6)
    assert rel_err2 < 3e-2, f"mismatch vs reference (B=64): rel err {rel_err2}"

    print("KERNEL_OK")
</pallas_src>

<mosaic_0001>
module attributes {stable_mosaic.version = 11 : i64} {
  func.func @_fused_mlp_kernel(%arg0: i32, %arg1: memref<8x1024xbf16, #tpu.memory_space<vmem>>, %arg2: memref<1024x128xbf16, #tpu.memory_space<vmem>>, %arg3: memref<1x128xf32, #tpu.memory_space<vmem>>, %arg4: memref<128x128xbf16, #tpu.memory_space<vmem>>, %arg5: memref<1x128xf32, #tpu.memory_space<vmem>>, %arg6: memref<128x128xbf16, #tpu.memory_space<vmem>>, %arg7: memref<1x128xf32, #tpu.memory_space<vmem>>, %arg8: memref<8x128xf32, #tpu.memory_space<vmem>>) attributes {dimension_semantics = [#tpu.dimension_semantics<parallel>], iteration_bounds = array<i64: 1>, scalar_prefetch = 0 : i64, scratch_operands = 0 : i64, tpu.core_type = #tpu.core_type<tc>, window_params = [{transform_indices = @transform_0, window_bounds = array<i64: 8, 1024>}, {pipeline_mode = #tpu.pipeline_mode<synchronous>, transform_indices = @transform_1, window_bounds = array<i64: 1024, 128>}, {pipeline_mode = #tpu.pipeline_mode<synchronous>, transform_indices = @transform_2, window_bounds = array<i64: 1, 128>}, {pipeline_mode = #tpu.pipeline_mode<synchronous>, transform_indices = @transform_3, window_bounds = array<i64: 128, 128>}, {pipeline_mode = #tpu.pipeline_mode<synchronous>, transform_indices = @transform_4, window_bounds = array<i64: 1, 128>}, {pipeline_mode = #tpu.pipeline_mode<synchronous>, transform_indices = @transform_5, window_bounds = array<i64: 128, 128>}, {pipeline_mode = #tpu.pipeline_mode<synchronous>, transform_indices = @transform_6, window_bounds = array<i64: 1, 128>}, {transform_indices = @transform_7, window_bounds = array<i64: 8, 128>}]} {
    %c0 = arith.constant 0 : index
    %c0_0 = arith.constant 0 : index
    %0 = vector.load %arg1[%c0, %c0_0] : memref<8x1024xbf16, #tpu.memory_space<vmem>>, vector<8x1024xbf16>
    %c0_1 = arith.constant 0 : index
    %c0_2 = arith.constant 0 : index
    %1 = vector.load %arg2[%c0_1, %c0_2] : memref<1024x128xbf16, #tpu.memory_space<vmem>>, vector<1024x128xbf16>
    %cst = arith.constant dense<0.000000e+00> : vector<8x128xf32>
    %2 = tpu.matmul %0, %1, %cst {dimension_numbers = #tpu.dot_dimension_numbers<[1], [0], [0], [1], [0, 0, 1, 1], [], []>} : vector<8x1024xbf16>, vector<1024x128xbf16>, vector<8x128xf32> -> vector<8x128xf32>
    %c0_3 = arith.constant 0 : index
    %c0_4 = arith.constant 0 : index
    %3 = vector.load %arg3[%c0_3, %c0_4] : memref<1x128xf32, #tpu.memory_space<vmem>>, vector<1x128xf32>
    %4 = vector.broadcast %3 : vector<1x128xf32> to vector<8x128xf32>
    %5 = arith.addf %2, %4 : vector<8x128xf32>
    %cst_5 = arith.constant 0.000000e+00 : f32
    %6 = vector.broadcast %cst_5 : f32 to vector<8x128xf32>
    %7 = arith.maximumf %5, %6 : vector<8x128xf32>
    %8 = arith.truncf %7 : vector<8x128xf32> to vector<8x128xbf16>
    %c0_6 = arith.constant 0 : index
    %c0_7 = arith.constant 0 : index
    %9 = vector.load %arg4[%c0_6, %c0_7] : memref<128x128xbf16, #tpu.memory_space<vmem>>, vector<128x128xbf16>
    %cst_8 = arith.constant dense<0.000000e+00> : vector<8x128xf32>
    %10 = tpu.matmul %8, %9, %cst_8 {dimension_numbers = #tpu.dot_dimension_numbers<[1], [0], [0], [1], [0, 0, 1, 1], [], []>} : vector<8x128xbf16>, vector<128x128xbf16>, vector<8x128xf32> -> vector<8x128xf32>
    %c0_9 = arith.constant 0 : index
    %c0_10 = arith.constant 0 : index
    %11 = vector.load %arg5[%c0_9, %c0_10] : memref<1x128xf32, #tpu.memory_space<vmem>>, vector<1x128xf32>
    %12 = vector.broadcast %11 : vector<1x128xf32> to vector<8x128xf32>
    %13 = arith.addf %10, %12 : vector<8x128xf32>
    %cst_11 = arith.constant 0.000000e+00 : f32
    %14 = vector.broadcast %cst_11 : f32 to vector<8x128xf32>
    %15 = arith.maximumf %13, %14 : vector<8x128xf32>
    %16 = arith.truncf %15 : vector<8x128xf32> to vector<8x128xbf16>
    %c0_12 = arith.constant 0 : index
    %c0_13 = arith.constant 0 : index
    %17 = vector.load %arg6[%c0_12, %c0_13] : memref<128x128xbf16, #tpu.memory_space<vmem>>, vector<128x128xbf16>
    %cst_14 = arith.constant dense<0.000000e+00> : vector<8x128xf32>
    %18 = tpu.matmul %16, %17, %cst_14 {dimension_numbers = #tpu.dot_dimension_numbers<[1], [0], [0], [1], [0, 0, 1, 1], [], []>} : vector<8x128xbf16>, vector<128x128xbf16>, vector<8x128xf32> -> vector<8x128xf32>
    %c0_15 = arith.constant 0 : index
    %c0_16 = arith.constant 0 : index
    %19 = vector.load %arg7[%c0_15, %c0_16] : memref<1x128xf32, #tpu.memory_space<vmem>>, vector<1x128xf32>
    %20 = vector.broadcast %19 : vector<1x128xf32> to vector<8x128xf32>
    %21 = arith.addf %18, %20 : vector<8x128xf32>
    %c0_17 = arith.constant 0 : index
    %c0_18 = arith.constant 0 : index
    %22 = vector.load %arg8[%c0_17, %c0_18] : memref<8x128xf32, #tpu.memory_space<vmem>>, vector<8x128xf32>
    tpu.vector_store %arg8[%c0_17, %c0_18], %21 {strides = array<i32>} : memref<8x128xf32, #tpu.memory_space<vmem>>, vector<8x128xf32>,
    return
  }
  func.func @transform_0(%arg0: i32) -> (i32, i32) {
    %c0_i32 = arith.constant 0 : i32
    %c0_i32_0 = arith.constant 0 : i32
    return %arg0, %c0_i32 : i32, i32
  }
  func.func @transform_1(%arg0: i32) -> (i32, i32) {
    %c0_i32 = arith.constant 0 : i32
    %c0_i32_0 = arith.constant 0 : i32
    %c0_i32_1 = arith.constant 0 : i32
    return %c0_i32, %c0_i32_0 : i32, i32
  }
  func.func @transform_2(%arg0: i32) -> (i32, i32) {
    %c0_i32 = arith.constant 0 : i32
    %c0_i32_0 = arith.constant 0 : i32
    %c0_i32_1 = arith.constant 0 : i32
    return %c0_i32, %c0_i32_0 : i32, i32
  }
  func.func @transform_3(%arg0: i32) -> (i32, i32) {
    %c0_i32 = arith.constant 0 : i32
    %c0_i32_0 = arith.constant 0 : i32
    %c0_i32_1 = arith.constant 0 : i32
    return %c0_i32, %c0_i32_0 : i32, i32
  }
  func.func @transform_4(%arg0: i32) -> (i32, i32) {
    %c0_i32 = arith.constant 0 : i32
    %c0_i32_0 = arith.constant 0 : i32
    %c0_i32_1 = arith.constant 0 : i32
    return %c0_i32, %c0_i32_0 : i32, i32
  }
  func.func @transform_5(%arg0: i32) -> (i32, i32) {
    %c0_i32 = arith.constant 0 : i32
    %c0_i32_0 = arith.constant 0 : i32
    %c0_i32_1 = arith.constant 0 : i32
    return %c0_i32, %c0_i32_0 : i32, i32
  }
  func.func @transform_6(%arg0: i32) -> (i32, i32) {
    %c0_i32 = arith.constant 0 : i32
    %c0_i32_0 = arith.constant 0 : i32
    %c0_i32_1 = arith.constant 0 : i32
    return %c0_i32, %c0_i32_0 : i32, i32
  }
  func.func @transform_7(%arg0: i32) -> (i32, i32) {
    %c0_i32 = arith.constant 0 : i32
    %c0_i32_0 = arith.constant 0 : i32
    return %arg0, %c0_i32 : i32, i32
  }
}

module attributes {stable_mosaic.version = 11 : i64} {
  func.func @_fused_mlp_kernel(%arg0: i32, %arg1: memref<8x1024xbf16, #tpu.memory_space<vmem>>, %arg2: memref<1024x128xbf16, #tpu.memory_space<vmem>>, %arg3: memref<1x128xf32, #tpu.memory_space<vmem>>, %arg4: memref<128x128xbf16, #tpu.memory_space<vmem>>, %arg5: memref<1x128xf32, #tpu.memory_space<vmem>>, %arg6: memref<128x128xbf16, #tpu.memory_space<vmem>>, %arg7: memref<1x128xf32, #tpu.memory_space<vmem>>, %arg8: memref<8x128xf32, #tpu.memory_space<vmem>>) attributes {dimension_semantics = [#tpu.dimension_semantics<parallel>], iteration_bounds = array<i64: 1>, scalar_prefetch = 0 : i64, scratch_operands = 0 : i64, tpu.core_type = #tpu.core_type<tc>, window_params = [{transform_indices = @transform_0, window_bounds = array<i64: 8, 1024>}, {pipeline_mode = #tpu.pipeline_mode<synchronous>, transform_indices = @transform_1, window_bounds = array<i64: 1024, 128>}, {pipeline_mode = #tpu.pipeline_mode<synchronous>, transform_indices = @transform_2, window_bounds = array<i64: 1, 128>}, {pipeline_mode = #tpu.pipeline_mode<synchronous>, transform_indices = @transform_3, window_bounds = array<i64: 128, 128>}, {pipeline_mode = #tpu.pipeline_mode<synchronous>, transform_indices = @transform_4, window_bounds = array<i64: 1, 128>}, {pipeline_mode = #tpu.pipeline_mode<synchronous>, transform_indices = @transform_5, window_bounds = array<i64: 128, 128>}, {pipeline_mode = #tpu.pipeline_mode<synchronous>, transform_indices = @transform_6, window_bounds = array<i64: 1, 128>}, {transform_indices = @transform_7, window_bounds = array<i64: 8, 128>}]} {
    %c0 = arith.constant 0 : index
    %c0_0 = arith.constant 0 : index
    %0 = vector.load %arg1[%c0, %c0_0] : memref<8x1024xbf16, #tpu.memory_space<vmem>>, vector<8x1024xbf16>
    %c0_1 = arith.constant 0 : index
    %c0_2 = arith.constant 0 : index
    %1 = vector.load %arg2[%c0_1, %c0_2] : memref<1024x128xbf16, #tpu.memory_space<vmem>>, vector<1024x128xbf16>
    %cst = arith.constant dense<0.000000e+00> : vector<8x128xf32>
    %2 = tpu.matmul %0, %1, %cst {dimension_numbers = #tpu.dot_dimension_numbers<[1], [0], [0], [1], [0, 0, 1, 1], [], []>} : vector<8x1024xbf16>, vector<1024x128xbf16>, vector<8x128xf32> -> vector<8x128xf32>
    %c0_3 = arith.constant 0 : index
    %c0_4 = arith.constant 0 : index
    %3 = vector.load %arg3[%c0_3, %c0_4] : memref<1x128xf32, #tpu.memory_space<vmem>>, vector<1x128xf32>
    %4 = vector.broadcast %3 : vector<1x128xf32> to vector<8x128xf32>
    %5 = arith.addf %2, %4 : vector<8x128xf32>
    %cst_5 = arith.constant 0.000000e+00 : f32
    %6 = vector.broadcast %cst_5 : f32 to vector<8x128xf32>
    %7 = arith.maximumf %5, %6 : vector<8x128xf32>
    %8 = arith.truncf %7 : vector<8x128xf32> to vector<8x128xbf16>
    %c0_6 = arith.constant 0 : index
    %c0_7 = arith.constant 0 : index
    %9 = vector.load %arg4[%c0_6, %c0_7] : memref<128x128xbf16, #tpu.memory_space<vmem>>, vector<128x128xbf16>
    %cst_8 = arith.constant dense<0.000000e+00> : vector<8x128xf32>
    %10 = tpu.matmul %8, %9, %cst_8 {dimension_numbers = #tpu.dot_dimension_numbers<[1], [0], [0], [1], [0, 0, 1, 1], [], []>} : vector<8x128xbf16>, vector<128x128xbf16>, vector<8x128xf32> -> vector<8x128xf32>
    %c0_9 = arith.constant 0 : index
    %c0_10 = arith.constant 0 : index
    %11 = vector.load %arg5[%c0_9, %c0_10] : memref<1x128xf32, #tpu.memory_space<vmem>>, vector<1x128xf32>
    %12 = vector.broadcast %11 : vector<1x128xf32> to vector<8x128xf32>
    %13 = arith.addf %10, %12 : vector<8x128xf32>
    %cst_11 = arith.constant 0.000000e+00 : f32
    %14 = vector.broadcast %cst_11 : f32 to vector<8x128xf32>
    %15 = arith.maximumf %13, %14 : vector<8x128xf32>
    %16 = arith.truncf %15 : vector<8x128xf32> to vector<8x128xbf16>
    %c0_12 = arith.constant 0 : index
    %c0_13 = arith.constant 0 : index
    %17 = vector.load %arg6[%c0_12, %c0_13] : memref<128x128xbf16, #tpu.memory_space<vmem>>, vector<128x128xbf16>
    %cst_14 = arith.constant dense<0.000000e+00> : vector<8x128xf32>
    %18 = tpu.matmul %16, %17, %cst_14 {dimension_numbers = #tpu.dot_dimension_numbers<[1], [0], [0], [1], [0, 0, 1, 1], [], []>} : vector<8x128xbf16>, vector<128x128xbf16>, vector<8x128xf32> -> vector<8x128xf32>
    %c0_15 = arith.constant 0 : index
    %c0_16 = arith.constant 0 : index
    %19 = vector.load %arg7[%c0_15, %c0_16] : memref<1x128xf32, #tpu.memory_space<vmem>>, vector<1x128xf32>
    %20 = vector.broadcast %19 : vector<1x128xf32> to vector<8x128xf32>
    %21 = arith.addf %18, %20 : vector<8x128xf32>
    %c0_17 = arith.constant 0 : index
    %c0_18 = arith.constant 0 : index
    %22 = vector.load %arg8[%c0_17, %c0_18] : memref<8x128xf32, #tpu.memory_space<vmem>>, vector<8x128xf32>
    tpu.vector_store %arg8[%c0_17, %c0_18], %21 {strides = array<i32>} : memref<8x128xf32, #tpu.memory_space<vmem>>, vector<8x128xf32>,
    return
  }
  func.func @transform_0(%arg0: i32) -> (i32, i32) {
    %c0_i32 = arith.constant 0 : i32
    %c0_i32_0 = arith.constant 0 : i32
    return %arg0, %c0_i32 : i32, i32
  }
  func.func @transform_1(%arg0: i32) -> (i32, i32) {
    %c0_i32 = arith.constant 0 : i32
    %c0_i32_0 = arith.constant 0 : i32
    %c0_i32_1 = arith.constant 0 : i32
    return %c0_i32, %c0_i32_0 : i32, i32
  }
  func.func @transform_2(%arg0: i32) -> (i32, i32) {
    %c0_i32 = arith.constant 0 : i32
    %c0_i32_0 = arith.constant 0 : i32
    %c0_i32_1 = arith.constant 0 : i32
    return %c0_i32, %c0_i32_0 : i32, i32
  }
  func.func @transform_3(%arg0: i32) -> (i32, i32) {
    %c0_i32 = arith.constant 0 : i32
    %c0_i32_0 = arith.constant 0 : i32
    %c0_i32_1 = arith.constant 0 : i32
    return %c0_i32, %c0_i32_0 : i32, i32
  }
  func.func @transform_4(%arg0: i32) -> (i32, i32) {
    %c0_i32 = arith.constant 0 : i32
    %c0_i32_0 = arith.constant 0 : i32
    %c0_i32_1 = arith.constant 0 : i32
    return %c0_i32, %c0_i32_0 : i32, i32
  }
  func.func @transform_5(%arg0: i32) -> (i32, i32) {
    %c0_i32 = arith.constant 0 : i32
    %c0_i32_0 = arith.constant 0 : i32
    %c0_i32_1 = arith.constant 0 : i32
    return %c0_i32, %c0_i32_0 : i32, i32
  }
  func.func @transform_6(%arg0: i32) -> (i32, i32) {
    %c0_i32 = arith.constant 0 : i32
    %c0_i32_0 = arith.constant 0 : i32
    %c0_i32_1 = arith.constant 0 : i32
    return %c0_i32, %c0_i32_0 : i32, i32
  }
  func.func @transform_7(%arg0: i32) -> (i32, i32) {
    %c0_i32 = arith.constant 0 : i32
    %c0_i32_0 = arith.constant 0 : i32
    return %arg0, %c0_i32 : i32, i32
  }
}

</mosaic_0001>

<llo_original>
// kernel: _mlp_forward_impl.1
$region0: #{_mlp_forward_impl.1}
  #allocation0 [shape = 'u32[]', space=smem, size = 0x4, offset = 0x4, fixed_abs, tag = 'smem constant byte address 0x4 - core index']
  #allocation1 [shape = 'u32[144,128]{1,0:T(1,128)}', space=vmem, size = 0x12000, scoped, tag = 'internal scratch']
  %s0 = inlined_call_operand.vmem [shape: bf16[8,1024], index: 0, kind: input, shape index: {}]
  %s1 = inlined_call_operand.hbm [shape: bf16[1024,128], index: 1, kind: input, shape index: {}]
  %s2 = inlined_call_operand.vmem [shape: f32[1,128], index: 2, kind: input, shape index: {}]
  %s3 = inlined_call_operand.vmem [shape: bf16[128,128], index: 3, kind: input, shape index: {}]
  %s4 = inlined_call_operand.vmem [shape: f32[1,128], index: 4, kind: input, shape index: {}]
  %s5 = inlined_call_operand.vmem [shape: bf16[128,128], index: 5, kind: input, shape index: {}]
  %s6 = inlined_call_operand.vmem [shape: f32[1,128], index: 6, kind: input, shape index: {}]
  %s7 = inlined_call_operand.vmem [shape: f32[8,128], index: 7, kind: output, shape index: {}]
  %s8 = sld [smem:[#allocation0]]
  $region42: #{_mlp_forward_impl.1} parent=0
    _
  %s10 = ssub.s32 1, %s8
  %s11 = scalar_select 0, %s10, %s8
  $region1: #{_mlp_forward_impl.1} parent=0
    #allocation2 [shape = 'u8[262144]{0}', space=vmem, size = 0x40000, scoped, tag = 'input window, operand 1, single buffered']
    #allocation3 [shape = 's32[1]{0}', space=sflag, size = 0x4, scoped, tag = 'scoped memory for _mlp_forward_impl.1']
    %12 = vsyncpa [#allocation3], 0
    // Predicated region
    $region2: #{_mlp_forward_impl.1} parent=1 // pred_check
      _
    $region3: #{_mlp_forward_impl.1} parent=1 // pred_check_branch
      %14 = sbr.rel (0) target = $region5
    $region4: #{_mlp_forward_impl.1} parent=1 // pred_region
      _
    $region5: #{_mlp_forward_impl.1} parent=1 // pred_fallthru
      _
    // Predicated region
    $region6: #{_mlp_forward_impl.1} parent=1 // pred_check
      _
    $region7: #{_mlp_forward_impl.1} parent=1 // pred_check_branch
      %16 = sbr.rel (0) target = $region9
    $region8: #{_mlp_forward_impl.1} parent=1 // pred_region
      %s18 = ssub.s32 8192, 8192
      %19 = vsyncadd [#allocation3], %s18
      %s20 = sshll.u32 [#allocation2], 4
      %s21 = int_to_ptr.vmem [resolvable:$true] %s20
      %26 = dma.hbm_to_vmem [thread:$0]  %s1, 8192, %s21, [#allocation3], 64, 64, 4
    $region9: #{_mlp_forward_impl.1} parent=1 // pred_fallthru
      _
    // Predicated region
    $region10: #{_mlp_forward_impl.1} parent=1 // pred_check
      _
    $region11: #{_mlp_forward_impl.1} parent=1 // pred_check_branch
      %28 = sbr.rel (0) target = $region13
    $region12: #{_mlp_forward_impl.1} parent=1 // pred_region
      _
    $region13: #{_mlp_forward_impl.1} parent=1 // pred_fallthru
      _
    // Predicated region
    $region14: #{_mlp_forward_impl.1} parent=1 // pred_check
      _
    $region15: #{_mlp_forward_impl.1} parent=1 // pred_check_branch
      %30 = sbr.rel (0) target = $region17
    $region16: #{_mlp_forward_impl.1} parent=1 // pred_region
      _
    $region17: #{_mlp_forward_impl.1} parent=1 // pred_fallthru
      _
    // Predicated region
    $region18: #{_mlp_forward_impl.1} parent=1 // pred_check
      _
    $region19: #{_mlp_forward_impl.1} parent=1 // pred_check_branch
      %32 = sbr.rel (0) target = $region21
    $region20: #{_mlp_forward_impl.1} parent=1 // pred_region
      _
    $region21: #{_mlp_forward_impl.1} parent=1 // pred_fallthru
      _
    // Predicated region
    $region22: #{_mlp_forward_impl.1} parent=1 // pred_check
      _
    $region23: #{_mlp_forward_impl.1} parent=1 // pred_check_branch
      %34 = sbr.rel (0) target = $region25
    $region24: #{_mlp_forward_impl.1} parent=1 // pred_region
      _
    $region25: #{_mlp_forward_impl.1} parent=1 // pred_fallthru
      _
    // Predicated region
    $region26: #{_mlp_forward_impl.1} parent=1 // pred_check
      _
    $region27: #{_mlp_forward_impl.1} parent=1 // pred_check_branch
      %36 = sbr.rel (0) target = $region29
    $region28: #{_mlp_forward_impl.1} parent=1 // pred_region
      _
    $region29: #{_mlp_forward_impl.1} parent=1 // pred_fallthru
      _
    // Predicated region
    $region30: #{_mlp_forward_impl.1} parent=1 // pred_check
      _
    $region31: #{_mlp_forward_impl.1} parent=1 // pred_check_branch
      %38 = sbr.rel (0) target = $region33
    $region32: #{_mlp_forward_impl.1} parent=1 // pred_region
      %39 = dma.done [#allocation3], 8192
    $region33: #{_mlp_forward_impl.1} parent=1 // pred_fallthru
      _
    %v41 = vld [vmem:[%s0] sm:$0xff]
    %v42 = vld [vmem:[%s0 + $0x8] sm:$0xff]
    %v43 = vld [vmem:[%s0 + $0x10] sm:$0xff]
    %v44 = vld [vmem:[%s0 + $0x18] sm:$0xff]
    %v45 = vld [vmem:[#allocation2] sm:$0xf]
    %v46 = vld [vmem:[#allocation2 + $0x4] sm:$0xf]
    %v47 = vld [vmem:[#allocation2 + $0x8] sm:$0xf]
    %v48 = vld [vmem:[#allocation2 + $0xc] sm:$0xf]
    %v49 = vld [vmem:[#allocation2 + $0x10] sm:$0xf]
    %v50 = vld [vmem:[#allocation2 + $0x14] sm:$0xf]
    %v51 = vld [vmem:[#allocation2 + $0x18] sm:$0xf]
    %v52 = vld [vmem:[#allocation2 + $0x1c] sm:$0xf]
    %v53 = vld [vmem:[#allocation2 + $0x20] sm:$0xf]
    %v54 = vld [vmem:[#allocation2 + $0x24] sm:$0xf]
    %v55 = vld [vmem:[#allocation2 + $0x28] sm:$0xf]
    %v56 = vld [vmem:[#allocation2 + $0x2c] sm:$0xf]
    %v57 = vld [vmem:[#allocation2 + $0x30] sm:$0xf]
    %v58 = vld [vmem:[#allocation2 + $0x34] sm:$0xf]
    %v59 = vld [vmem:[#allocation2 + $0x38] sm:$0xf]
    %v60 = vld [vmem:[#allocation2 + $0x3c] sm:$0xf]
    %v61 = vld [vmem:[#allocation2 + $0x40] sm:$0xf]
    %v62 = vld [vmem:[#allocation2 + $0x44] sm:$0xf]
    %v63 = vld [vmem:[#allocation2 + $0x48] sm:$0xf]
    %v64 = vld [vmem:[#allocation2 + $0x4c] sm:$0xf]
    %v65 = vld [vmem:[#allocation2 + $0x50] sm:$0xf]
    %v66 = vld [vmem:[#allocation2 + $0x54] sm:$0xf]
    %v67 = vld [vmem:[#allocation2 + $0x58] sm:$0xf]
    %v68 = vld [vmem:[#allocation2 + $0x5c] sm:$0xf]
    %v69 = vld [vmem:[#allocation2 + $0x60] sm:$0xf]
    %v70 = vld [vmem:[#allocation2 + $0x64] sm:$0xf]
    %v71 = vld [vmem:[#allocation2 + $0x68] sm:$0xf]
    %v72 = vld [vmem:[#allocation2 + $0x6c] sm:$0xf]
    %v73 = vld [vmem:[#allocation2 + $0x70] sm:$0xf]
    %v74 = vld [vmem:[#allocation2 + $0x74] sm:$0xf]
    %v75 = vld [vmem:[#allocation2 + $0x78] sm:$0xf]
    %v76 = vld [vmem:[#allocation2 + $0x7c] sm:$0xf]
    %v77 = vld [vmem:[#allocation2 + $0x80] sm:$0xf]
    %v78 = vld [vmem:[#allocation2 + $0x84] sm:$0xf]
    %v79 = vld [vmem:[#allocation2 + $0x88] sm:$0xf]
    %v80 = vld [vmem:[#allocation2 + $0x8c] sm:$0xf]
    %v81 = vld [vmem:[#allocation2 + $0x90] sm:$0xf]
    %v82 = vld [vmem:[#allocation2 + $0x94] sm:$0xf]
    %v83 = vld [vmem:[#allocation2 + $0x98] sm:$0xf]
    %v84 = vld [vmem:[#allocation2 + $0x9c] sm:$0xf]
    %v85 = vld [vmem:[#allocation2 + $0xa0] sm:$0xf]
    %v86 = vld [vmem:[#allocation2 + $0xa4] sm:$0xf]
    %v87 = vld [vmem:[#allocation2 + $0xa8] sm:$0xf]
    %v88 = vld [vmem:[#allocation2 + $0xac] sm:$0xf]
    %v89 = vld [vmem:[#allocation2 + $0xb0] sm:$0xf]
    %v90 = vld [vmem:[#allocation2 + $0xb4] sm:$0xf]
    %v91 = vld [vmem:[#allocation2 + $0xb8] sm:$0xf]
    %v92 = vld [vmem:[#allocation2 + $0xbc] sm:$0xf]
    %v93 = vld [vmem:[#allocation2 + $0xc0] sm:$0xf]
    %v94 = vld [vmem:[#allocation2 + $0xc4] sm:$0xf]
    %v95 = vld [vmem:[#allocation2 + $0xc8] sm:$0xf]
    %v96 = vld [vmem:[#allocation2 + $0xcc] sm:$0xf]
    %v97 = vld [vmem:[#allocation2 + $0xd0] sm:$0xf]
    %v98 = vld [vmem:[#allocation2 + $0xd4] sm:$0xf]
    %v99 = vld [vmem:[#allocation2 + $0xd8] sm:$0xf]
    %v100 = vld [vmem:[#allocation2 + $0xdc] sm:$0xf]
    %v101 = vld [vmem:[#allocation2 + $0xe0] sm:$0xf]
    %v102 = vld [vmem:[#allocation2 + $0xe4] sm:$0xf]
    %v103 = vld [vmem:[#allocation2 + $0xe8] sm:$0xf]
    %v104 = vld [vmem:[#allocation2 + $0xec] sm:$0xf]
    %v105 = vld [vmem:[#allocation2 + $0xf0] sm:$0xf]
    %v106 = vld [vmem:[#allocation2 + $0xf4] sm:$0xf]
    %v107 = vld [vmem:[#allocation2 + $0xf8] sm:$0xf]
    %v108 = vld [vmem:[#allocation2 + $0xfc] sm:$0xf]
    %v109 = vld [vmem:[#allocation2 + $0x100] sm:$0xf]
    %v110 = vld [vmem:[#allocation2 + $0x104] sm:$0xf]
    %v111 = vld [vmem:[#allocation2 + $0x108] sm:$0xf]
    %v112 = vld [vmem:[#allocation2 + $0x10c] sm:$0xf]
    %v113 = vld [vmem:[#allocation2 + $0x110] sm:$0xf]
    %v114 = vld [vmem:[#allocation2 + $0x114] sm:$0xf]
    %v115 = vld [vmem:[#allocation2 + $0x118] sm:$0xf]
    %v116 = vld [vmem:[#allocation2 + $0x11c] sm:$0xf]
    %v117 = vld [vmem:[#allocation2 + $0x120] sm:$0xf]
    %v118 = vld [vmem:[#allocation2 + $0x124] sm:$0xf]
    %v119 = vld [vmem:[#allocation2 + $0x128] sm:$0xf]
    %v120 = vld [vmem:[#allocation2 + $0x12c] sm:$0xf]
    %v121 = vld [vmem:[#allocation2 + $0x130] sm:$0xf]
    %v122 = vld [vmem:[#allocation2 + $0x134] sm:$0xf]
    %v123 = vld [vmem:[#allocation2 + $0x138] sm:$0xf]
    %v124 = vld [vmem:[#allocation2 + $0x13c] sm:$0xf]
    %v125 = vld [vmem:[#allocation2 + $0x140] sm:$0xf]
    %v126 = vld [vmem:[#allocation2 + $0x144] sm:$0xf]
    %v127 = vld [vmem:[#allocation2 + $0x148] sm:$0xf]
    %v128 = vld [vmem:[#allocation2 + $0x14c] sm:$0xf]
    %v129 = vld [vmem:[#allocation2 + $0x150] sm:$0xf]
    %v130 = vld [vmem:[#allocation2 + $0x154] sm:$0xf]
    %v131 = vld [vmem:[#allocation2 + $0x158] sm:$0xf]
    %v132 = vld [vmem:[#allocation2 + $0x15c] sm:$0xf]
    %v133 = vld [vmem:[#allocation2 + $0x160] sm:$0xf]
    %v134 = vld [vmem:[#allocation2 + $0x164] sm:$0xf]
    %v135 = vld [vmem:[#allocation2 + $0x168] sm:$0xf]
    %v136 = vld [vmem:[#allocation2 + $0x16c] sm:$0xf]
    %v137 = vld [vmem:[#allocation2 + $0x170] sm:$0xf]
    %v138 = vld [vmem:[#allocation2 + $0x174] sm:$0xf]
    %v139 = vld [vmem:[#allocation2 + $0x178] sm:$0xf]
    %v140 = vld [vmem:[#allocation2 + $0x17c] sm:$0xf]
    %v141 = vld [vmem:[#allocation2 + $0x180] sm:$0xf]
    %v142 = vld [vmem:[#allocation2 + $0x184] sm:$0xf]
    %v143 = vld [vmem:[#allocation2 + $0x188] sm:$0xf]
    %v144 = vld [vmem:[#allocation2 + $0x18c] sm:$0xf]
    %v145 = vld [vmem:[#allocation2 + $0x190] sm:$0xf]
    %v146 = vld [vmem:[#allocation2 + $0x194] sm:$0xf]
    %v147 = vld [vmem:[#allocation2 + $0x198] sm:$0xf]
    %v148 = vld [vmem:[#allocation2 + $0x19c] sm:$0xf]
    %v149 = vld [vmem:[#allocation2 + $0x1a0] sm:$0xf]
    %v150 = vld [vmem:[#allocation2 + $0x1a4] sm:$0xf]
    %v151 = vld [vmem:[#allocation2 + $0x1a8] sm:$0xf]
    %v152 = vld [vmem:[#allocation2 + $0x1ac] sm:$0xf]
    %v153 = vld [vmem:[#allocation2 + $0x1b0] sm:$0xf]
    %v154 = vld [vmem:[#allocation2 + $0x1b4] sm:$0xf]
    %v155 = vld [vmem:[#allocation2 + $0x1b8] sm:$0xf]
    %v156 = vld [vmem:[#allocation2 + $0x1bc] sm:$0xf]
    %v157 = vld [vmem:[#allocation2 + $0x1c0] sm:$0xf]
    %v158 = vld [vmem:[#allocation2 + $0x1c4] sm:$0xf]
    %v159 = vld [vmem:[#allocation2 + $0x1c8] sm:$0xf]
    %v160 = vld [vmem:[#allocation2 + $0x1cc] sm:$0xf]
    %v161 = vld [vmem:[#allocation2 + $0x1d0] sm:$0xf]
    %v162 = vld [vmem:[#allocation2 + $0x1d4] sm:$0xf]
    %v163 = vld [vmem:[#allocation2 + $0x1d8] sm:$0xf]
    %v164 = vld [vmem:[#allocation2 + $0x1dc] sm:$0xf]
    %v165 = vld [vmem:[#allocation2 + $0x1e0] sm:$0xf]
    %v166 = vld [vmem:[#allocation2 + $0x1e4] sm:$0xf]
    %v167 = vld [vmem:[#allocation2 + $0x1e8] sm:$0xf]
    %v168 = vld [vmem:[#allocation2 + $0x1ec] sm:$0xf]
    %v169 = vld [vmem:[#allocation2 + $0x1f0] sm:$0xf]
    %v170 = vld [vmem:[#allocation2 + $0x1f4] sm:$0xf]
    %v171 = vld [vmem:[#allocation2 + $0x1f8] sm:$0xf]
    %v172 = vld [vmem:[#allocation2 + $0x1fc] sm:$0xf]
    %v173 = vld [vmem:[%s2] sm:$0x1]
    %v175 = vlaneseq
    %v176 = vshrl.u32 %v175, 7
    %v177 = vsub.s32 0, %v176
    %v178 = vrot.slane %v173, %v177
    %v184 = vunpack.c.l.b16 %v41
    %v185 = vunpack.c.h.b16 %v41
    %v186 = vunpack.c.l.b16 %v42
    %v187 = vunpack.c.h.b16 %v42
    %v188 = vunpack.c.l.b16 %v43
    %v189 = vunpack.c.h.b16 %v43
    %v190 = vunpack.c.l.b16 %v44
    %v191 = vunpack.c.h.b16 %v44
    %v192 = vpack.c.b16 %v184, %v184
    %v193 = vpack.c.b16 %v185, %v185
    %v194 = vpack.c.b16 %v186, %v186
    %v195 = vpack.c.b16 %v187, %v187
    %v196 = vpack.c.b16 %v188, %v188
    %v197 = vpack.c.b16 %v189, %v189
    %v198 = vpack.c.b16 %v190, %v190
    %v199 = vpack.c.b16 %v191, %v191
    %v336 = vunpack.c.l.b16 %v45
    %v337 = vunpack.c.l.b16 %v46
    %v338 = vunpack.c.l.b16 %v47
    %v339 = vunpack.c.l.b16 %v48
    %v340 = vunpack.c.l.b16 %v49
    %v341 = vunpack.c.l.b16 %v50
    %v342 = vunpack.c.l.b16 %v51
    %v343 = vunpack.c.l.b16 %v52
    %v344 = vunpack.c.l.b16 %v53
    %v345 = vunpack.c.l.b16 %v54
    %v346 = vunpack.c.l.b16 %v55
    %v347 = vunpack.c.l.b16 %v56
    %v348 = vunpack.c.l.b16 %v57
    %v349 = vunpack.c.l.b16 %v58
    %v350 = vunpack.c.l.b16 %v59
    %v351 = vunpack.c.l.b16 %v60
    %v352 = vunpack.c.l.b16 %v61
    %v353 = vunpack.c.l.b16 %v62
    %v354 = vunpack.c.l.b16 %v63
    %v355 = vunpack.c.l.b16 %v64
    %v356 = vunpack.c.l.b16 %v65
    %v357 = vunpack.c.l.b16 %v66
    %v358 = vunpack.c.l.b16 %v67
    %v359 = vunpack.c.l.b16 %v68
    %v360 = vunpack.c.l.b16 %v69
    %v361 = vunpack.c.l.b16 %v70
    %v362 = vunpack.c.l.b16 %v71
    %v363 = vunpack.c.l.b16 %v72
    %v364 = vunpack.c.l.b16 %v73
    %v365 = vunpack.c.l.b16 %v74
    %v366 = vunpack.c.l.b16 %v75
    %v367 = vunpack.c.l.b16 %v76
    %v368 = vunpack.c.l.b16 %v77
    %v369 = vunpack.c.l.b16 %v78
    %v370 = vunpack.c.l.b16 %v79
    %v371 = vunpack.c.l.b16 %v80
    %v372 = vunpack.c.l.b16 %v81
    %v373 = vunpack.c.l.b16 %v82
    %v374 = vunpack.c.l.b16 %v83
    %v375 = vunpack.c.l.b16 %v84
    %v376 = vunpack.c.l.b16 %v85
    %v377 = vunpack.c.l.b16 %v86
    %v378 = vunpack.c.l.b16 %v87
    %v379 = vunpack.c.l.b16 %v88
    %v380 = vunpack.c.l.b16 %v89
    %v381 = vunpack.c.l.b16 %v90
    %v382 = vunpack.c.l.b16 %v91
    %v383 = vunpack.c.l.b16 %v92
    %v384 = vunpack.c.l.b16 %v93
    %v385 = vunpack.c.l.b16 %v94
    %v386 = vunpack.c.l.b16 %v95
    %v387 = vunpack.c.l.b16 %v96
    %v388 = vunpack.c.l.b16 %v97
    %v389 = vunpack.c.l.b16 %v98
    %v390 = vunpack.c.l.b16 %v99
    %v391 = vunpack.c.l.b16 %v100
    %v392 = vunpack.c.l.b16 %v101
    %v393 = vunpack.c.l.b16 %v102
    %v394 = vunpack.c.l.b16 %v103
    %v395 = vunpack.c.l.b16 %v104
    %v396 = vunpack.c.l.b16 %v105
    %v397 = vunpack.c.l.b16 %v106
    %v398 = vunpack.c.l.b16 %v107
    %v399 = vunpack.c.l.b16 %v108
    %v400 = vunpack.c.l.b16 %v109
    %v401 = vunpack.c.l.b16 %v110
    %v402 = vunpack.c.l.b16 %v111
    %v403 = vunpack.c.l.b16 %v112
    %v404 = vunpack.c.l.b16 %v113
    %v405 = vunpack.c.l.b16 %v114
    %v406 = vunpack.c.l.b16 %v115
    %v407 = vunpack.c.l.b16 %v116
    %v408 = vunpack.c.l.b16 %v117
    %v409 = vunpack.c.l.b16 %v118
    %v410 = vunpack.c.l.b16 %v119
    %v411 = vunpack.c.l.b16 %v120
    %v412 = vunpack.c.l.b16 %v121
    %v413 = vunpack.c.l.b16 %v122
    %v414 = vunpack.c.l.b16 %v123
    %v415 = vunpack.c.l.b16 %v124
    %v416 = vunpack.c.l.b16 %v125
    %v417 = vunpack.c.l.b16 %v126
    %v418 = vunpack.c.l.b16 %v127
    %v419 = vunpack.c.l.b16 %v128
    %v420 = vunpack.c.l.b16 %v129
    %v421 = vunpack.c.l.b16 %v130
    %v422 = vunpack.c.l.b16 %v131
    %v423 = vunpack.c.l.b16 %v132
    %v424 = vunpack.c.l.b16 %v133
    %v425 = vunpack.c.l.b16 %v134
    %v426 = vunpack.c.l.b16 %v135
    %v427 = vunpack.c.l.b16 %v136
    %v428 = vunpack.c.l.b16 %v137
    %v429 = vunpack.c.l.b16 %v138
    %v430 = vunpack.c.l.b16 %v139
    %v431 = vunpack.c.l.b16 %v140
    %v432 = vunpack.c.l.b16 %v141
    %v433 = vunpack.c.l.b16 %v142
    %v434 = vunpack.c.l.b16 %v143
    %v435 = vunpack.c.l.b16 %v144
    %v436 = vunpack.c.l.b16 %v145
    %v437 = vunpack.c.l.b16 %v146
    %v438 = vunpack.c.l.b16 %v147
    %v439 = vunpack.c.l.b16 %v148
    %v440 = vunpack.c.l.b16 %v149
    %v441 = vunpack.c.l.b16 %v150
    %v442 = vunpack.c.l.b16 %v151
    %v443 = vunpack.c.l.b16 %v152
    %v444 = vunpack.c.l.b16 %v153
    %v445 = vunpack.c.l.b16 %v154
    %v446 = vunpack.c.l.b16 %v155
    %v447 = vunpack.c.l.b16 %v156
    %v448 = vunpack.c.l.b16 %v157
    %v449 = vunpack.c.l.b16 %v158
    %v450 = vunpack.c.l.b16 %v159
    %v451 = vunpack.c.l.b16 %v160
    %v452 = vunpack.c.l.b16 %v161
    %v453 = vunpack.c.l.b16 %v162
    %v454 = vunpack.c.l.b16 %v163
    %v455 = vunpack.c.l.b16 %v164
    %v456 = vunpack.c.l.b16 %v165
    %v457 = vunpack.c.l.b16 %v166
    %v458 = vunpack.c.l.b16 %v167
    %v459 = vunpack.c.l.b16 %v168
    %v460 = vunpack.c.l.b16 %v169
    %v461 = vunpack.c.l.b16 %v170
    %v462 = vunpack.c.l.b16 %v171
    %v463 = vunpack.c.l.b16 %v172
    %v464 = vpack.c.b16 %v337, %v336
    %v465 = vpack.c.b16 %v339, %v338
    %v466 = vpack.c.b16 %v341, %v340
    %v467 = vpack.c.b16 %v343, %v342
    %v468 = vpack.c.b16 %v345, %v344
    %v469 = vpack.c.b16 %v347, %v346
    %v470 = vpack.c.b16 %v349, %v348
    %v471 = vpack.c.b16 %v351, %v350
    %v472 = vpack.c.b16 %v353, %v352
    %v473 = vpack.c.b16 %v355, %v354
    %v474 = vpack.c.b16 %v357, %v356
    %v475 = vpack.c.b16 %v359, %v358
    %v476 = vpack.c.b16 %v361, %v360
    %v477 = vpack.c.b16 %v363, %v362
    %v478 = vpack.c.b16 %v365, %v364
    %v479 = vpack.c.b16 %v367, %v366
    %v480 = vpack.c.b16 %v369, %v368
    %v481 = vpack.c.b16 %v371, %v370
    %v482 = vpack.c.b16 %v373, %v372
    %v483 = vpack.c.b16 %v375, %v374
    %v484 = vpack.c.b16 %v377, %v376
    %v485 = vpack.c.b16 %v379, %v378
    %v486 = vpack.c.b16 %v381, %v380
    %v487 = vpack.c.b16 %v383, %v382
    %v488 = vpack.c.b16 %v385, %v384
    %v489 = vpack.c.b16 %v387, %v386
    %v490 = vpack.c.b16 %v389, %v388
    %v491 = vpack.c.b16 %v391, %v390
    %v492 = vpack.c.b16 %v393, %v392
    %v493 = vpack.c.b16 %v395, %v394
    %v494 = vpack.c.b16 %v397, %v396
    %v495 = vpack.c.b16 %v399, %v398
    %v496 = vpack.c.b16 %v401, %v400
    %v497 = vpack.c.b16 %v403, %v402
    %v498 = vpack.c.b16 %v405, %v404
    %v499 = vpack.c.b16 %v407, %v406
    %v500 = vpack.c.b16 %v409, %v408
    %v501 = vpack.c.b16 %v411, %v410
    %v502 = vpack.c.b16 %v413, %v412
    %v503 = vpack.c.b16 %v415, %v414
    %v504 = vpack.c.b16 %v417, %v416
    %v505 = vpack.c.b16 %v419, %v418
    %v506 = vpack.c.b16 %v421, %v420
    %v507 = vpack.c.b16 %v423, %v422
    %v508 = vpack.c.b16 %v425, %v424
    %v509 = vpack.c.b16 %v427, %v426
    %v510 = vpack.c.b16 %v429, %v428
    %v511 = vpack.c.b16 %v431, %v430
    %v512 = vpack.c.b16 %v433, %v432
    %v513 = vpack.c.b16 %v435, %v434
    %v514 = vpack.c.b16 %v437, %v436
    %v515 = vpack.c.b16 %v439, %v438
    %v516 = vpack.c.b16 %v441, %v440
    %v517 = vpack.c.b16 %v443, %v442
    %v518 = vpack.c.b16 %v445, %v444
    %v519 = vpack.c.b16 %v447, %v446
    %v520 = vpack.c.b16 %v449, %v448
    %v521 = vpack.c.b16 %v451, %v450
    %v522 = vpack.c.b16 %v453, %v452
    %v523 = vpack.c.b16 %v455, %v454
    %v524 = vpack.c.b16 %v457, %v456
    %v525 = vpack.c.b16 %v459, %v458
    %v526 = vpack.c.b16 %v461, %v460
    %v527 = vpack.c.b16 %v463, %v462
    %592 = vmatprep.subr.bf16.mxu0 0
    %593 = vmatpush1.bf16.msra.mxu0 %v471
    %594 = vmatprep.subr.bf16.mxu0 0
    %595 = vmatpush1.bf16.msra.mxu0 %v470
    %596 = vmatprep.subr.bf16.mxu0 0
    %597 = vmatpush1.bf16.msra.mxu0 %v469
    %598 = vmatprep.subr.bf16.mxu0 0
    %599 = vmatpush1.bf16.msra.mxu0 %v468
    %600 = vmatprep.subr.bf16.mxu0 0
    %601 = vmatpush1.bf16.msra.mxu0 %v467
    %602 = vmatprep.subr.bf16.mxu0 0
    %603 = vmatpush1.bf16.msra.mxu0 %v466
    %604 = vmatprep.subr.bf16.mxu0 0
    %605 = vmatpush1.bf16.msra.mxu0 %v465
    %606 = vmatprep.subr.bf16.mxu0 0
    %607 = vmatpush1.bf16.msra.mxu0 %v464
    %608 = vmatprep.subr.bf16.mxu0 0
    %609 = vmatpush2.bf16.msra.mxu0 %v479
    %610 = vmatprep.subr.bf16.mxu0 0
    %611 = vmatpush2.bf16.msra.mxu0 %v478
    %612 = vmatprep.subr.bf16.mxu0 0
    %613 = vmatpush2.bf16.msra.mxu0 %v477
    %614 = vmatprep.subr.bf16.mxu0 0
    %615 = vmatpush2.bf16.msra.mxu0 %v476
    %616 = vmatprep.subr.bf16.mxu0 0
    %617 = vmatpush2.bf16.msra.mxu0 %v475
    %618 = vmatprep.subr.bf16.mxu0 0
    %619 = vmatpush2.bf16.msra.mxu0 %v474
    %620 = vmatprep.subr.bf16.mxu0 0
    %621 = vmatpush2.bf16.msra.mxu0 %v473
    %622 = vmatprep.subr.bf16.mxu0 0
    %623 = vmatpush2.bf16.msra.mxu0 %v472
    %624 = vmatprep.mubr.bf16.mxu0 %v193
    %625 = vmatmul.mubr.bf16.gmra.mxu0 %v192
    %v626 = vpop.f32.mrf.mxu0
    %v627 = vadd.f32 %v178, %v626
    %v628 = vpop.f32.mrf.mxu0
    %v629 = vpop.f32.mrf.mxu0
    %v630 = vpop.f32.mrf.mxu0
    %631 = vdwg.mxu0
    %632 = vmatprep.subr.bf16.mxu0 0
    %633 = vmatpush1.bf16.msra.mxu0 %v487
    %634 = vmatprep.subr.bf16.mxu0 0
    %635 = vmatpush1.bf16.msra.mxu0 %v486
    %636 = vmatprep.subr.bf16.mxu0 0
    %637 = vmatpush1.bf16.msra.mxu0 %v485
    %638 = vmatprep.subr.bf16.mxu0 0
    %639 = vmatpush1.bf16.msra.mxu0 %v484
    %640 = vmatprep.subr.bf16.mxu0 0
    %641 = vmatpush1.bf16.msra.mxu0 %v483
    %642 = vmatprep.subr.bf16.mxu0 0
    %643 = vmatpush1.bf16.msra.mxu0 %v482
    %644 = vmatprep.subr.bf16.mxu0 0
    %645 = vmatpush1.bf16.msra.mxu0 %v481
    %646 = vmatprep.subr.bf16.mxu0 0
    %647 = vmatpush1.bf16.msra.mxu0 %v480
    %648 = vmatprep.subr.bf16.mxu0 0
    %649 = vmatpush2.bf16.msra.mxu0 %v495
    %650 = vmatprep.subr.bf16.mxu0 0
    %651 = vmatpush2.bf16.msra.mxu0 %v494
    %652 = vmatprep.subr.bf16.mxu0 0
    %653 = vmatpush2.bf16.msra.mxu0 %v493
    %654 = vmatprep.subr.bf16.mxu0 0
    %655 = vmatpush2.bf16.msra.mxu0 %v492
    %656 = vmatprep.subr.bf16.mxu0 0
    %657 = vmatpush2.bf16.msra.mxu0 %v491
    %658 = vmatprep.subr.bf16.mxu0 0
    %659 = vmatpush2.bf16.msra.mxu0 %v490
    %660 = vmatprep.subr.bf16.mxu0 0
    %661 = vmatpush2.bf16.msra.mxu0 %v489
    %662 = vmatprep.subr.bf16.mxu0 0
    %663 = vmatpush2.bf16.msra.mxu0 %v488
    %664 = vmatprep.mubr.bf16.mxu0 %v195
    %665 = vmatmul.mubr.bf16.gmra.mxu0 %v194
    %v666 = vpop.f32.mrf.mxu0
    %v667 = vadd.f32 %v627, %v666
    %v668 = vpop.f32.mrf.mxu0
    %v669 = vpop.f32.mrf.mxu0
    %v670 = vpop.f32.mrf.mxu0
    %671 = vdwg.mxu0
    %672 = vmatprep.subr.bf16.mxu0 0
    %673 = vmatpush1.bf16.msra.mxu0 %v503
    %674 = vmatprep.subr.bf16.mxu0 0
    %675 = vmatpush1.bf16.msra.mxu0 %v502
    %676 = vmatprep.subr.bf16.mxu0 0
    %677 = vmatpush1.bf16.msra.mxu0 %v501
    %678 = vmatprep.subr.bf16.mxu0 0
    %679 = vmatpush1.bf16.msra.mxu0 %v500
    %680 = vmatprep.subr.bf16.mxu0 0
    %681 = vmatpush1.bf16.msra.mxu0 %v499
    %682 = vmatprep.subr.bf16.mxu0 0
    %683 = vmatpush1.bf16.msra.mxu0 %v498
    %684 = vmatprep.subr.bf16.mxu0 0
    %685 = vmatpush1.bf16.msra.mxu0 %v497
    %686 = vmatprep.subr.bf16.mxu0 0
    %687 = vmatpush1.bf16.msra.mxu0 %v496
    %688 = vmatprep.subr.bf16.mxu0 0
    %689 = vmatpush2.bf16.msra.mxu0 %v511
    %690 = vmatprep.subr.bf16.mxu0 0
    %691 = vmatpush2.bf16.msra.mxu0 %v510
    %692 = vmatprep.subr.bf16.mxu0 0
    %693 = vmatpush2.bf16.msra.mxu0 %v509
    %694 = vmatprep.subr.bf16.mxu0 0
    %695 = vmatpush2.bf16.msra.mxu0 %v508
    %696 = vmatprep.subr.bf16.mxu0 0
    %697 = vmatpush2.bf16.msra.mxu0 %v507
    %698 = vmatprep.subr.bf16.mxu0 0
    %699 = vmatpush2.bf16.msra.mxu0 %v506
    %700 = vmatprep.subr.bf16.mxu0 0
    %701 = vmatpush2.bf16.msra.mxu0 %v505
    %702 = vmatprep.subr.bf16.mxu0 0
    %703 = vmatpush2.bf16.msra.mxu0 %v504
    %704 = vmatprep.mubr.bf16.mxu0 %v197
    %705 = vmatmul.mubr.bf16.gmra.mxu0 %v196
    %v706 = vpop.f32.mrf.mxu0
    %v707 = vadd.f32 %v667, %v706
    %v708 = vpop.f32.mrf.mxu0
    %v709 = vpop.f32.mrf.mxu0
    %v710 = vpop.f32.mrf.mxu0
    %711 = vdwg.mxu0
    %712 = vmatprep.subr.bf16.mxu0 0
    %713 = vmatpush1.bf16.msra.mxu0 %v519
    %714 = vmatprep.subr.bf16.mxu0 0
    %715 = vmatpush1.bf16.msra.mxu0 %v518
    %716 = vmatprep.subr.bf16.mxu0 0
    %717 = vmatpush1.bf16.msra.mxu0 %v517
    %718 = vmatprep.subr.bf16.mxu0 0
    %719 = vmatpush1.bf16.msra.mxu0 %v516
    %720 = vmatprep.subr.bf16.mxu0 0
    %721 = vmatpush1.bf16.msra.mxu0 %v515
    %722 = vmatprep.subr.bf16.mxu0 0
    %723 = vmatpush1.bf16.msra.mxu0 %v514
    %724 = vmatprep.subr.bf16.mxu0 0
    %725 = vmatpush1.bf16.msra.mxu0 %v513
    %726 = vmatprep.subr.bf16.mxu0 0
    %727 = vmatpush1.bf16.msra.mxu0 %v512
    %728 = vmatprep.subr.bf16.mxu0 0
    %729 = vmatpush2.bf16.msra.mxu0 %v527
    %730 = vmatprep.subr.bf16.mxu0 0
    %731 = vmatpush2.bf16.msra.mxu0 %v526
    %732 = vmatprep.subr.bf16.mxu0 0
    %733 = vmatpush2.bf16.msra.mxu0 %v525
    %734 = vmatprep.subr.bf16.mxu0 0
    %735 = vmatpush2.bf16.msra.mxu0 %v524
    %736 = vmatprep.subr.bf16.mxu0 0
    %737 = vmatpush2.bf16.msra.mxu0 %v523
    %738 = vmatprep.subr.bf16.mxu0 0
    %739 = vmatpush2.bf16.msra.mxu0 %v522
    %740 = vmatprep.subr.bf16.mxu0 0
    %741 = vmatpush2.bf16.msra.mxu0 %v521
    %742 = vmatprep.subr.bf16.mxu0 0
    %743 = vmatpush2.bf16.msra.mxu0 %v520
    %744 = vmatprep.mubr.bf16.mxu0 %v199
    %745 = vmatmul.mubr.bf16.gmra.mxu0 %v198
    %v746 = vpop.f32.mrf.mxu0
    %v747 = vadd.f32 %v707, %v746
    %v748 = vpop.f32.mrf.mxu0
    %v749 = vpop.f32.mrf.mxu0
    %v750 = vpop.f32.mrf.mxu0
    %751 = vdwg.mxu0
    %v752 = vmax.f32 %v747, 0.0
    %v753 = vpack.c.bf16 %v752, %v752
    %v754 = vld [vmem:[%s3] sm:$0xf]
    %v755 = vld [vmem:[%s3 + $0x4] sm:$0xf]
    %v756 = vld [vmem:[%s3 + $0x8] sm:$0xf]
    %v757 = vld [vmem:[%s3 + $0xc] sm:$0xf]
    %v758 = vld [vmem:[%s3 + $0x10] sm:$0xf]
    %v759 = vld [vmem:[%s3 + $0x14] sm:$0xf]
    %v760 = vld [vmem:[%s3 + $0x18] sm:$0xf]
    %v761 = vld [vmem:[%s3 + $0x1c] sm:$0xf]
    %v762 = vld [vmem:[%s3 + $0x20] sm:$0xf]
    %v763 = vld [vmem:[%s3 + $0x24] sm:$0xf]
    %v764 = vld [vmem:[%s3 + $0x28] sm:$0xf]
    %v765 = vld [vmem:[%s3 + $0x2c] sm:$0xf]
    %v766 = vld [vmem:[%s3 + $0x30] sm:$0xf]
    %v767 = vld [vmem:[%s3 + $0x34] sm:$0xf]
    %v768 = vld [vmem:[%s3 + $0x38] sm:$0xf]
    %v769 = vld [vmem:[%s3 + $0x3c] sm:$0xf]
    %v770 = vld [vmem:[%s4] sm:$0x1]
    %v772 = vlaneseq
    %v773 = vshrl.u32 %v772, 7
    %v774 = vsub.s32 0, %v773
    %v775 = vrot.slane %v770, %v774
    %v793 = vunpack.c.l.b16 %v754
    %v794 = vunpack.c.l.b16 %v755
    %v795 = vunpack.c.l.b16 %v756
    %v796 = vunpack.c.l.b16 %v757
    %v797 = vunpack.c.l.b16 %v758
    %v798 = vunpack.c.l.b16 %v759
    %v799 = vunpack.c.l.b16 %v760
    %v800 = vunpack.c.l.b16 %v761
    %v801 = vunpack.c.l.b16 %v762
    %v802 = vunpack.c.l.b16 %v763
    %v803 = vunpack.c.l.b16 %v764
    %v804 = vunpack.c.l.b16 %v765
    %v805 = vunpack.c.l.b16 %v766
    %v806 = vunpack.c.l.b16 %v767
    %v807 = vunpack.c.l.b16 %v768
    %v808 = vunpack.c.l.b16 %v769
    %v809 = vpack.c.b16 %v794, %v793
    %v810 = vpack.c.b16 %v796, %v795
    %v811 = vpack.c.b16 %v798, %v797
    %v812 = vpack.c.b16 %v800, %v799
    %v813 = vpack.c.b16 %v802, %v801
    %v814 = vpack.c.b16 %v804, %v803
    %v815 = vpack.c.b16 %v806, %v805
    %v816 = vpack.c.b16 %v808, %v807
    %825 = vmatprep.subr.bf16.mxu0 0
    %826 = vmatpush1.bf16.msra.mxu0 %v816
    %827 = vmatprep.subr.bf16.mxu0 0
    %828 = vmatpush1.bf16.msra.mxu0 %v815
    %829 = vmatprep.subr.bf16.mxu0 0
    %830 = vmatpush1.bf16.msra.mxu0 %v814
    %831 = vmatprep.subr.bf16.mxu0 0
    %832 = vmatpush1.bf16.msra.mxu0 %v813
    %833 = vmatprep.subr.bf16.mxu0 0
    %834 = vmatpush1.bf16.msra.mxu0 %v812
    %835 = vmatprep.subr.bf16.mxu0 0
    %836 = vmatpush1.bf16.msra.mxu0 %v811
    %837 = vmatprep.subr.bf16.mxu0 0
    %838 = vmatpush1.bf16.msra.mxu0 %v810
    %839 = vmatprep.subr.bf16.mxu0 0
    %840 = vmatpush1.bf16.msra.mxu0 %v809
    %841 = vmatprep.subr.bf16.mxu0 0
    %842 = vmatpush2.bf16.msra.mxu0 0
    %843 = vmatprep.subr.bf16.mxu0 0
    %844 = vmatpush2.bf16.msra.mxu0 0
    %845 = vmatprep.subr.bf16.mxu0 0
    %846 = vmatpush2.bf16.msra.mxu0 0
    %847 = vmatprep.subr.bf16.mxu0 0
    %848 = vmatpush2.bf16.msra.mxu0 0
    %849 = vmatprep.subr.bf16.mxu0 0
    %850 = vmatpush2.bf16.msra.mxu0 0
    %851 = vmatprep.subr.bf16.mxu0 0
    %852 = vmatpush2.bf16.msra.mxu0 0
    %853 = vmatprep.subr.bf16.mxu0 0
    %854 = vmatpush2.bf16.msra.mxu0 0
    %855 = vmatprep.subr.bf16.mxu0 0
    %856 = vmatpush2.bf16.msra.mxu0 0
    %857 = vmatprep.mubr.bf16.mxu0 0
    %858 = vmatmul.mubr.bf16.gmra.mxu0 %v753
    %v859 = vpop.f32.mrf.mxu0
    %v860 = vadd.f32 %v775, %v859
    %v861 = vpop.f32.mrf.mxu0
    %v862 = vpop.f32.mrf.mxu0
    %v863 = vpop.f32.mrf.mxu0
    %864 = vdwg.mxu0
    %v865 = vmax.f32 %v860, 0.0
    %v866 = vpack.c.bf16 %v865, %v865
    %v867 = vld [vmem:[%s5] sm:$0xf]
    %v868 = vld [vmem:[%s5 + $0x4] sm:$0xf]
    %v869 = vld [vmem:[%s5 + $0x8] sm:$0xf]
    %v870 = vld [vmem:[%s5 + $0xc] sm:$0xf]
    %v871 = vld [vmem:[%s5 + $0x10] sm:$0xf]
    %v872 = vld [vmem:[%s5 + $0x14] sm:$0xf]
    %v873 = vld [vmem:[%s5 + $0x18] sm:$0xf]
    %v874 = vld [vmem:[%s5 + $0x1c] sm:$0xf]
    %v875 = vld [vmem:[%s5 + $0x20] sm:$0xf]
    %v876 = vld [vmem:[%s5 + $0x24] sm:$0xf]
    %v877 = vld [vmem:[%s5 + $0x28] sm:$0xf]
    %v878 = vld [vmem:[%s5 + $0x2c] sm:$0xf]
    %v879 = vld [vmem:[%s5 + $0x30] sm:$0xf]
    %v880 = vld [vmem:[%s5 + $0x34] sm:$0xf]
    %v881 = vld [vmem:[%s5 + $0x38] sm:$0xf]
    %v882 = vld [vmem:[%s5 + $0x3c] sm:$0xf]
    %v883 = vld [vmem:[%s6] sm:$0x1]
    %v885 = vlaneseq
    %v886 = vshrl.u32 %v885, 7
    %v887 = vsub.s32 0, %v886
    %v888 = vrot.slane %v883, %v887
    %v906 = vunpack.c.l.b16 %v867
    %v907 = vunpack.c.l.b16 %v868
    %v908 = vunpack.c.l.b16 %v869
    %v909 = vunpack.c.l.b16 %v870
    %v910 = vunpack.c.l.b16 %v871
    %v911 = vunpack.c.l.b16 %v872
    %v912 = vunpack.c.l.b16 %v873
    %v913 = vunpack.c.l.b16 %v874
    %v914 = vunpack.c.l.b16 %v875
    %v915 = vunpack.c.l.b16 %v876
    %v916 = vunpack.c.l.b16 %v877
    %v917 = vunpack.c.l.b16 %v878
    %v918 = vunpack.c.l.b16 %v879
    %v919 = vunpack.c.l.b16 %v880
    %v920 = vunpack.c.l.b16 %v881
    %v921 = vunpack.c.l.b16 %v882
    %v922 = vpack.c.b16 %v907, %v906
    %v923 = vpack.c.b16 %v909, %v908
    %v924 = vpack.c.b16 %v911, %v910
    %v925 = vpack.c.b16 %v913, %v912
    %v926 = vpack.c.b16 %v915, %v914
    %v927 = vpack.c.b16 %v917, %v916
    %v928 = vpack.c.b16 %v919, %v918
    %v929 = vpack.c.b16 %v921, %v920
    %938 = vmatprep.subr.bf16.mxu0 0
    %939 = vmatpush1.bf16.msra.mxu0 %v929
    %940 = vmatprep.subr.bf16.mxu0 0
    %941 = vmatpush1.bf16.msra.mxu0 %v928
    %942 = vmatprep.subr.bf16.mxu0 0
    %943 = vmatpush1.bf16.msra.mxu0 %v927
    %944 = vmatprep.subr.bf16.mxu0 0
    %945 = vmatpush1.bf16.msra.mxu0 %v926
    %946 = vmatprep.subr.bf16.mxu0 0
    %947 = vmatpush1.bf16.msra.mxu0 %v925
    %948 = vmatprep.subr.bf16.mxu0 0
    %949 = vmatpush1.bf16.msra.mxu0 %v924
    %950 = vmatprep.subr.bf16.mxu0 0
    %951 = vmatpush1.bf16.msra.mxu0 %v923
    %952 = vmatprep.subr.bf16.mxu0 0
    %953 = vmatpush1.bf16.msra.mxu0 %v922
    %954 = vmatprep.subr.bf16.mxu0 0
    %955 = vmatpush2.bf16.msra.mxu0 0
    %956 = vmatprep.subr.bf16.mxu0 0
    %957 = vmatpush2.bf16.msra.mxu0 0
    %958 = vmatprep.subr.bf16.mxu0 0
    %959 = vmatpush2.bf16.msra.mxu0 0
    %960 = vmatprep.subr.bf16.mxu0 0
    %961 = vmatpush2.bf16.msra.mxu0 0
    %962 = vmatprep.subr.bf16.mxu0 0
    %963 = vmatpush2.bf16.msra.mxu0 0
    %964 = vmatprep.subr.bf16.mxu0 0
    %965 = vmatpush2.bf16.msra.mxu0 0
    %966 = vmatprep.subr.bf16.mxu0 0
    %967 = vmatpush2.bf16.msra.mxu0 0
    %968 = vmatprep.subr.bf16.mxu0 0
    %969 = vmatpush2.bf16.msra.mxu0 0
    %970 = vmatprep.mubr.bf16.mxu0 0
    %971 = vmatmul.mubr.bf16.gmra.mxu0 %v866
    %v972 = vpop.f32.mrf.mxu0
    %v973 = vadd.f32 %v888, %v972
    %v974 = vpop.f32.mrf.mxu0
    %v975 = vpop.f32.mrf.mxu0
    %v976 = vpop.f32.mrf.mxu0
    %977 = vdwg.mxu0
    %978 = vst [vmem:[%s7] sm:$0xff] %v973
    // Predicated region
    $region34: #{_mlp_forward_impl.1} parent=1 // pred_check
      _
    $region35: #{_mlp_forward_impl.1} parent=1 // pred_check_branch
      %980 = sbr.rel (0) target = $region37
    $region36: #{_mlp_forward_impl.1} parent=1 // pred_region
      _
    $region37: #{_mlp_forward_impl.1} parent=1 // pred_fallthru
      _
    // Predicated region
    $region38: #{_mlp_forward_impl.1} parent=1 // pred_check
      _
    $region39: #{_mlp_forward_impl.1} parent=1 // pred_check_branch
      %982 = sbr.rel (0) target = $region41
    $region40: #{_mlp_forward_impl.1} parent=1 // pred_region
      _
    $region41: #{_mlp_forward_impl.1} parent=1 // pred_fallthru
      _
    %983 = vsyncpa [#allocation3], 1

// kernel: _mlp_forward_impl.1
$region0: #{_mlp_forward_impl.1}
  #allocation0 [shape = 'u32[]', space=smem, size = 0x4, offset = 0x4, fixed_abs, tag = 'smem constant byte address 0x4 - core index']
  #allocation1 [shape = 'u32[144,128]{1,0:T(1,128)}', space=vmem, size = 0x12000, scoped, tag = 'internal scratch']
  %s0 = inlined_call_operand.vmem [shape: bf16[8,1024], index: 0, kind: input, shape index: {}]
  %s1 = inlined_call_operand.hbm [shape: bf16[1024,128], index: 1, kind: input, shape index: {}]
  %s2 = inlined_call_operand.vmem [shape: f32[1,128], index: 2, kind: input, shape index: {}]
  %s3 = inlined_call_operand.vmem [shape: bf16[128,128], index: 3, kind: input, shape index: {}]
  %s4 = inlined_call_operand.vmem [shape: f32[1,128], index: 4, kind: input, shape index: {}]
  %s5 = inlined_call_operand.vmem [shape: bf16[128,128], index: 5, kind: input, shape index: {}]
  %s6 = inlined_call_operand.vmem [shape: f32[1,128], index: 6, kind: input, shape index: {}]
  %s7 = inlined_call_operand.vmem [shape: f32[8,128], index: 7, kind: output, shape index: {}]
  %s8 = sld [smem:[#allocation0]]
  $region42: #{_mlp_forward_impl.1} parent=0
    _
  %s10 = ssub.s32 1, %s8
  %s11 = scalar_select 0, %s10, %s8
  $region1: #{_mlp_forward_impl.1} parent=0
    #allocation2 [shape = 'u8[262144]{0}', space=vmem, size = 0x40000, scoped, tag = 'input window, operand 1, single buffered']
    #allocation3 [shape = 's32[1]{0}', space=sflag, size = 0x4, scoped, tag = 'scoped memory for _mlp_forward_impl.1']
    %12 = vsyncpa [#allocation3], 0
    // Predicated region
    $region2: #{_mlp_forward_impl.1} parent=1 // pred_check
      _
    $region3: #{_mlp_forward_impl.1} parent=1 // pred_check_branch
      %14 = sbr.rel (0) target = $region5
    $region4: #{_mlp_forward_impl.1} parent=1 // pred_region
      _
    $region5: #{_mlp_forward_impl.1} parent=1 // pred_fallthru
      _
    // Predicated region
    $region6: #{_mlp_forward_impl.1} parent=1 // pred_check
      _
    $region7: #{_mlp_forward_impl.1} parent=1 // pred_check_branch
      %16 = sbr.rel (0) target = $region9
    $region8: #{_mlp_forward_impl.1} parent=1 // pred_region
      %s18 = ssub.s32 8192, 8192
      %19 = vsyncadd [#allocation3], %s18
      %s20 = sshll.u32 [#allocation2], 4
      %s21 = int_to_ptr.vmem [resolvable:$true] %s20
      %26 = dma.hbm_to_vmem [thread:$0]  %s1, 8192, %s21, [#allocation3], 64, 64, 4
    $region9: #{_mlp_forward_impl.1} parent=1 // pred_fallthru
      _
    // Predicated region
    $region10: #{_mlp_forward_impl.1} parent=1 // pred_check
      _
    $region11: #{_mlp_forward_impl.1} parent=1 // pred_check_branch
      %28 = sbr.rel (0) target = $region13
    $region12: #{_mlp_forward_impl.1} parent=1 // pred_region
      _
    $region13: #{_mlp_forward_impl.1} parent=1 // pred_fallthru
      _
    // Predicated region
    $region14: #{_mlp_forward_impl.1} parent=1 // pred_check
      _
    $region15: #{_mlp_forward_impl.1} parent=1 // pred_check_branch
      %30 = sbr.rel (0) target = $region17
    $region16: #{_mlp_forward_impl.1} parent=1 // pred_region
      _
    $region17: #{_mlp_forward_impl.1} parent=1 // pred_fallthru
      _
    // Predicated region
    $region18: #{_mlp_forward_impl.1} parent=1 // pred_check
      _
    $region19: #{_mlp_forward_impl.1} parent=1 // pred_check_branch
      %32 = sbr.rel (0) target = $region21
    $region20: #{_mlp_forward_impl.1} parent=1 // pred_region
      _
    $region21: #{_mlp_forward_impl.1} parent=1 // pred_fallthru
      _
    // Predicated region
    $region22: #{_mlp_forward_impl.1} parent=1 // pred_check
      _
    $region23: #{_mlp_forward_impl.1} parent=1 // pred_check_branch
      %34 = sbr.rel (0) target = $region25
    $region24: #{_mlp_forward_impl.1} parent=1 // pred_region
      _
    $region25: #{_mlp_forward_impl.1} parent=1 // pred_fallthru
      _
    // Predicated region
    $region26: #{_mlp_forward_impl.1} parent=1 // pred_check
      _
    $region27: #{_mlp_forward_impl.1} parent=1 // pred_check_branch
      %36 = sbr.rel (0) target = $region29
    $region28: #{_mlp_forward_impl.1} parent=1 // pred_region
      _
    $region29: #{_mlp_forward_impl.1} parent=1 // pred_fallthru
      _
    // Predicated region
    $region30: #{_mlp_forward_impl.1} parent=1 // pred_check
      _
    $region31: #{_mlp_forward_impl.1} parent=1 // pred_check_branch
      %38 = sbr.rel (0) target = $region33
    $region32: #{_mlp_forward_impl.1} parent=1 // pred_region
      %39 = dma.done [#allocation3], 8192
    $region33: #{_mlp_forward_impl.1} parent=1 // pred_fallthru
      _
    %v41 = vld [vmem:[%s0] sm:$0xff]
    %v42 = vld [vmem:[%s0 + $0x8] sm:$0xff]
    %v43 = vld [vmem:[%s0 + $0x10] sm:$0xff]
    %v44 = vld [vmem:[%s0 + $0x18] sm:$0xff]
    %v45 = vld [vmem:[#allocation2] sm:$0xf]
    %v46 = vld [vmem:[#allocation2 + $0x4] sm:$0xf]
    %v47 = vld [vmem:[#allocation2 + $0x8] sm:$0xf]
    %v48 = vld [vmem:[#allocation2 + $0xc] sm:$0xf]
    %v49 = vld [vmem:[#allocation2 + $0x10] sm:$0xf]
    %v50 = vld [vmem:[#allocation2 + $0x14] sm:$0xf]
    %v51 = vld [vmem:[#allocation2 + $0x18] sm:$0xf]
    %v52 = vld [vmem:[#allocation2 + $0x1c] sm:$0xf]
    %v53 = vld [vmem:[#allocation2 + $0x20] sm:$0xf]
    %v54 = vld [vmem:[#allocation2 + $0x24] sm:$0xf]
    %v55 = vld [vmem:[#allocation2 + $0x28] sm:$0xf]
    %v56 = vld [vmem:[#allocation2 + $0x2c] sm:$0xf]
    %v57 = vld [vmem:[#allocation2 + $0x30] sm:$0xf]
    %v58 = vld [vmem:[#allocation2 + $0x34] sm:$0xf]
    %v59 = vld [vmem:[#allocation2 + $0x38] sm:$0xf]
    %v60 = vld [vmem:[#allocation2 + $0x3c] sm:$0xf]
    %v61 = vld [vmem:[#allocation2 + $0x40] sm:$0xf]
    %v62 = vld [vmem:[#allocation2 + $0x44] sm:$0xf]
    %v63 = vld [vmem:[#allocation2 + $0x48] sm:$0xf]
    %v64 = vld [vmem:[#allocation2 + $0x4c] sm:$0xf]
    %v65 = vld [vmem:[#allocation2 + $0x50] sm:$0xf]
    %v66 = vld [vmem:[#allocation2 + $0x54] sm:$0xf]
    %v67 = vld [vmem:[#allocation2 + $0x58] sm:$0xf]
    %v68 = vld [vmem:[#allocation2 + $0x5c] sm:$0xf]
    %v69 = vld [vmem:[#allocation2 + $0x60] sm:$0xf]
    %v70 = vld [vmem:[#allocation2 + $0x64] sm:$0xf]
    %v71 = vld [vmem:[#allocation2 + $0x68] sm:$0xf]
    %v72 = vld [vmem:[#allocation2 + $0x6c] sm:$0xf]
    %v73 = vld [vmem:[#allocation2 + $0x70] sm:$0xf]
    %v74 = vld [vmem:[#allocation2 + $0x74] sm:$0xf]
    %v75 = vld [vmem:[#allocation2 + $0x78] sm:$0xf]
    %v76 = vld [vmem:[#allocation2 + $0x7c] sm:$0xf]
    %v77 = vld [vmem:[#allocation2 + $0x80] sm:$0xf]
    %v78 = vld [vmem:[#allocation2 + $0x84] sm:$0xf]
    %v79 = vld [vmem:[#allocation2 + $0x88] sm:$0xf]
    %v80 = vld [vmem:[#allocation2 + $0x8c] sm:$0xf]
    %v81 = vld [vmem:[#allocation2 + $0x90] sm:$0xf]
    %v82 = vld [vmem:[#allocation2 + $0x94] sm:$0xf]
    %v83 = vld [vmem:[#allocation2 + $0x98] sm:$0xf]
    %v84 = vld [vmem:[#allocation2 + $0x9c] sm:$0xf]
    %v85 = vld [vmem:[#allocation2 + $0xa0] sm:$0xf]
    %v86 = vld [vmem:[#allocation2 + $0xa4] sm:$0xf]
    %v87 = vld [vmem:[#allocation2 + $0xa8] sm:$0xf]
    %v88 = vld [vmem:[#allocation2 + $0xac] sm:$0xf]
    %v89 = vld [vmem:[#allocation2 + $0xb0] sm:$0xf]
    %v90 = vld [vmem:[#allocation2 + $0xb4] sm:$0xf]
    %v91 = vld [vmem:[#allocation2 + $0xb8] sm:$0xf]
    %v92 = vld [vmem:[#allocation2 + $0xbc] sm:$0xf]
    %v93 = vld [vmem:[#allocation2 + $0xc0] sm:$0xf]
    %v94 = vld [vmem:[#allocation2 + $0xc4] sm:$0xf]
    %v95 = vld [vmem:[#allocation2 + $0xc8] sm:$0xf]
    %v96 = vld [vmem:[#allocation2 + $0xcc] sm:$0xf]
    %v97 = vld [vmem:[#allocation2 + $0xd0] sm:$0xf]
    %v98 = vld [vmem:[#allocation2 + $0xd4] sm:$0xf]
    %v99 = vld [vmem:[#allocation2 + $0xd8] sm:$0xf]
    %v100 = vld [vmem:[#allocation2 + $0xdc] sm:$0xf]
    %v101 = vld [vmem:[#allocation2 + $0xe0] sm:$0xf]
    %v102 = vld [vmem:[#allocation2 + $0xe4] sm:$0xf]
    %v103 = vld [vmem:[#allocation2 + $0xe8] sm:$0xf]
    %v104 = vld [vmem:[#allocation2 + $0xec] sm:$0xf]
    %v105 = vld [vmem:[#allocation2 + $0xf0] sm:$0xf]
    %v106 = vld [vmem:[#allocation2 + $0xf4] sm:$0xf]
    %v107 = vld [vmem:[#allocation2 + $0xf8] sm:$0xf]
    %v108 = vld [vmem:[#allocation2 + $0xfc] sm:$0xf]
    %v109 = vld [vmem:[#allocation2 + $0x100] sm:$0xf]
    %v110 = vld [vmem:[#allocation2 + $0x104] sm:$0xf]
    %v111 = vld [vmem:[#allocation2 + $0x108] sm:$0xf]
    %v112 = vld [vmem:[#allocation2 + $0x10c] sm:$0xf]
    %v113 = vld [vmem:[#allocation2 + $0x110] sm:$0xf]
    %v114 = vld [vmem:[#allocation2 + $0x114] sm:$0xf]
    %v115 = vld [vmem:[#allocation2 + $0x118] sm:$0xf]
    %v116 = vld [vmem:[#allocation2 + $0x11c] sm:$0xf]
    %v117 = vld [vmem:[#allocation2 + $0x120] sm:$0xf]
    %v118 = vld [vmem:[#allocation2 + $0x124] sm:$0xf]
    %v119 = vld [vmem:[#allocation2 + $0x128] sm:$0xf]
    %v120 = vld [vmem:[#allocation2 + $0x12c] sm:$0xf]
    %v121 = vld [vmem:[#allocation2 + $0x130] sm:$0xf]
    %v122 = vld [vmem:[#allocation2 + $0x134] sm:$0xf]
    %v123 = vld [vmem:[#allocation2 + $0x138] sm:$0xf]
    %v124 = vld [vmem:[#allocation2 + $0x13c] sm:$0xf]
    %v125 = vld [vmem:[#allocation2 + $0x140] sm:$0xf]
    %v126 = vld [vmem:[#allocation2 + $0x144] sm:$0xf]
    %v127 = vld [vmem:[#allocation2 + $0x148] sm:$0xf]
    %v128 = vld [vmem:[#allocation2 + $0x14c] sm:$0xf]
    %v129 = vld [vmem:[#allocation2 + $0x150] sm:$0xf]
    %v130 = vld [vmem:[#allocation2 + $0x154] sm:$0xf]
    %v131 = vld [vmem:[#allocation2 + $0x158] sm:$0xf]
    %v132 = vld [vmem:[#allocation2 + $0x15c] sm:$0xf]
    %v133 = vld [vmem:[#allocation2 + $0x160] sm:$0xf]
    %v134 = vld [vmem:[#allocation2 + $0x164] sm:$0xf]
    %v135 = vld [vmem:[#allocation2 + $0x168] sm:$0xf]
    %v136 = vld [vmem:[#allocation2 + $0x16c] sm:$0xf]
    %v137 = vld [vmem:[#allocation2 + $0x170] sm:$0xf]
    %v138 = vld [vmem:[#allocation2 + $0x174] sm:$0xf]
    %v139 = vld [vmem:[#allocation2 + $0x178] sm:$0xf]
    %v140 = vld [vmem:[#allocation2 + $0x17c] sm:$0xf]
    %v141 = vld [vmem:[#allocation2 + $0x180] sm:$0xf]
    %v142 = vld [vmem:[#allocation2 + $0x184] sm:$0xf]
    %v143 = vld [vmem:[#allocation2 + $0x188] sm:$0xf]
    %v144 = vld [vmem:[#allocation2 + $0x18c] sm:$0xf]
    %v145 = vld [vmem:[#allocation2 + $0x190] sm:$0xf]
    %v146 = vld [vmem:[#allocation2 + $0x194] sm:$0xf]
    %v147 = vld [vmem:[#allocation2 + $0x198] sm:$0xf]
    %v148 = vld [vmem:[#allocation2 + $0x19c] sm:$0xf]
    %v149 = vld [vmem:[#allocation2 + $0x1a0] sm:$0xf]
    %v150 = vld [vmem:[#allocation2 + $0x1a4] sm:$0xf]
    %v151 = vld [vmem:[#allocation2 + $0x1a8] sm:$0xf]
    %v152 = vld [vmem:[#allocation2 + $0x1ac] sm:$0xf]
    %v153 = vld [vmem:[#allocation2 + $0x1b0] sm:$0xf]
    %v154 = vld [vmem:[#allocation2 + $0x1b4] sm:$0xf]
    %v155 = vld [vmem:[#allocation2 + $0x1b8] sm:$0xf]
    %v156 = vld [vmem:[#allocation2 + $0x1bc] sm:$0xf]
    %v157 = vld [vmem:[#allocation2 + $0x1c0] sm:$0xf]
    %v158 = vld [vmem:[#allocation2 + $0x1c4] sm:$0xf]
    %v159 = vld [vmem:[#allocation2 + $0x1c8] sm:$0xf]
    %v160 = vld [vmem:[#allocation2 + $0x1cc] sm:$0xf]
    %v161 = vld [vmem:[#allocation2 + $0x1d0] sm:$0xf]
    %v162 = vld [vmem:[#allocation2 + $0x1d4] sm:$0xf]
    %v163 = vld [vmem:[#allocation2 + $0x1d8] sm:$0xf]
    %v164 = vld [vmem:[#allocation2 + $0x1dc] sm:$0xf]
    %v165 = vld [vmem:[#allocation2 + $0x1e0] sm:$0xf]
    %v166 = vld [vmem:[#allocation2 + $0x1e4] sm:$0xf]
    %v167 = vld [vmem:[#allocation2 + $0x1e8] sm:$0xf]
    %v168 = vld [vmem:[#allocation2 + $0x1ec] sm:$0xf]
    %v169 = vld [vmem:[#allocation2 + $0x1f0] sm:$0xf]
    %v170 = vld [vmem:[#allocation2 + $0x1f4] sm:$0xf]
    %v171 = vld [vmem:[#allocation2 + $0x1f8] sm:$0xf]
    %v172 = vld [vmem:[#allocation2 + $0x1fc] sm:$0xf]
    %v173 = vld [vmem:[%s2] sm:$0x1]
    %v175 = vlaneseq
    %v176 = vshrl.u32 %v175, 7
    %v177 = vsub.s32 0, %v176
    %v178 = vrot.slane %v173, %v177
    %v184 = vunpack.c.l.b16 %v41
    %v185 = vunpack.c.h.b16 %v41
    %v186 = vunpack.c.l.b16 %v42
    %v187 = vunpack.c.h.b16 %v42
    %v188 = vunpack.c.l.b16 %v43
    %v189 = vunpack.c.h.b16 %v43
    %v190 = vunpack.c.l.b16 %v44
    %v191 = vunpack.c.h.b16 %v44
    %v192 = vpack.c.b16 %v184, %v184
    %v193 = vpack.c.b16 %v185, %v185
    %v194 = vpack.c.b16 %v186, %v186
    %v195 = vpack.c.b16 %v187, %v187
    %v196 = vpack.c.b16 %v188, %v188
    %v197 = vpack.c.b16 %v189, %v189
    %v198 = vpack.c.b16 %v190, %v190
    %v199 = vpack.c.b16 %v191, %v191
    %v336 = vunpack.c.l.b16 %v45
    %v337 = vunpack.c.l.b16 %v46
    %v338 = vunpack.c.l.b16 %v47
    %v339 = vunpack.c.l.b16 %v48
    %v340 = vunpack.c.l.b16 %v49
    %v341 = vunpack.c.l.b16 %v50
    %v342 = vunpack.c.l.b16 %v51
    %v343 = vunpack.c.l.b16 %v52
    %v344 = vunpack.c.l.b16 %v53
    %v345 = vunpack.c.l.b16 %v54
    %v346 = vunpack.c.l.b16 %v55
    %v347 = vunpack.c.l.b16 %v56
    %v348 = vunpack.c.l.b16 %v57
    %v349 = vunpack.c.l.b16 %v58
    %v350 = vunpack.c.l.b16 %v59
    %v351 = vunpack.c.l.b16 %v60
    %v352 = vunpack.c.l.b16 %v61
    %v353 = vunpack.c.l.b16 %v62
    %v354 = vunpack.c.l.b16 %v63
    %v355 = vunpack.c.l.b16 %v64
    %v356 = vunpack.c.l.b16 %v65
    %v357 = vunpack.c.l.b16 %v66
    %v358 = vunpack.c.l.b16 %v67
    %v359 = vunpack.c.l.b16 %v68
    %v360 = vunpack.c.l.b16 %v69
    %v361 = vunpack.c.l.b16 %v70
    %v362 = vunpack.c.l.b16 %v71
    %v363 = vunpack.c.l.b16 %v72
    %v364 = vunpack.c.l.b16 %v73
    %v365 = vunpack.c.l.b16 %v74
    %v366 = vunpack.c.l.b16 %v75
    %v367 = vunpack.c.l.b16 %v76
    %v368 = vunpack.c.l.b16 %v77
    %v369 = vunpack.c.l.b16 %v78
    %v370 = vunpack.c.l.b16 %v79
    %v371 = vunpack.c.l.b16 %v80
    %v372 = vunpack.c.l.b16 %v81
    %v373 = vunpack.c.l.b16 %v82
    %v374 = vunpack.c.l.b16 %v83
    %v375 = vunpack.c.l.b16 %v84
    %v376 = vunpack.c.l.b16 %v85
    %v377 = vunpack.c.l.b16 %v86
    %v378 = vunpack.c.l.b16 %v87
    %v379 = vunpack.c.l.b16 %v88
    %v380 = vunpack.c.l.b16 %v89
    %v381 = vunpack.c.l.b16 %v90
    %v382 = vunpack.c.l.b16 %v91
    %v383 = vunpack.c.l.b16 %v92
    %v384 = vunpack.c.l.b16 %v93
    %v385 = vunpack.c.l.b16 %v94
    %v386 = vunpack.c.l.b16 %v95
    %v387 = vunpack.c.l.b16 %v96
    %v388 = vunpack.c.l.b16 %v97
    %v389 = vunpack.c.l.b16 %v98
    %v390 = vunpack.c.l.b16 %v99
    %v391 = vunpack.c.l.b16 %v100
    %v392 = vunpack.c.l.b16 %v101
    %v393 = vunpack.c.l.b16 %v102
    %v394 = vunpack.c.l.b16 %v103
    %v395 = vunpack.c.l.b16 %v104
    %v396 = vunpack.c.l.b16 %v105
    %v397 = vunpack.c.l.b16 %v106
    %v398 = vunpack.c.l.b16 %v107
    %v399 = vunpack.c.l.b16 %v108
    %v400 = vunpack.c.l.b16 %v109
    %v401 = vunpack.c.l.b16 %v110
    %v402 = vunpack.c.l.b16 %v111
    %v403 = vunpack.c.l.b16 %v112
    %v404 = vunpack.c.l.b16 %v113
    %v405 = vunpack.c.l.b16 %v114
    %v406 = vunpack.c.l.b16 %v115
    %v407 = vunpack.c.l.b16 %v116
    %v408 = vunpack.c.l.b16 %v117
    %v409 = vunpack.c.l.b16 %v118
    %v410 = vunpack.c.l.b16 %v119
    %v411 = vunpack.c.l.b16 %v120
    %v412 = vunpack.c.l.b16 %v121
    %v413 = vunpack.c.l.b16 %v122
    %v414 = vunpack.c.l.b16 %v123
    %v415 = vunpack.c.l.b16 %v124
    %v416 = vunpack.c.l.b16 %v125
    %v417 = vunpack.c.l.b16 %v126
    %v418 = vunpack.c.l.b16 %v127
    %v419 = vunpack.c.l.b16 %v128
    %v420 = vunpack.c.l.b16 %v129
    %v421 = vunpack.c.l.b16 %v130
    %v422 = vunpack.c.l.b16 %v131
    %v423 = vunpack.c.l.b16 %v132
    %v424 = vunpack.c.l.b16 %v133
    %v425 = vunpack.c.l.b16 %v134
    %v426 = vunpack.c.l.b16 %v135
    %v427 = vunpack.c.l.b16 %v136
    %v428 = vunpack.c.l.b16 %v137
    %v429 = vunpack.c.l.b16 %v138
    %v430 = vunpack.c.l.b16 %v139
    %v431 = vunpack.c.l.b16 %v140
    %v432 = vunpack.c.l.b16 %v141
    %v433 = vunpack.c.l.b16 %v142
    %v434 = vunpack.c.l.b16 %v143
    %v435 = vunpack.c.l.b16 %v144
    %v436 = vunpack.c.l.b16 %v145
    %v437 = vunpack.c.l.b16 %v146
    %v438 = vunpack.c.l.b16 %v147
    %v439 = vunpack.c.l.b16 %v148
    %v440 = vunpack.c.l.b16 %v149
    %v441 = vunpack.c.l.b16 %v150
    %v442 = vunpack.c.l.b16 %v151
    %v443 = vunpack.c.l.b16 %v152
    %v444 = vunpack.c.l.b16 %v153
    %v445 = vunpack.c.l.b16 %v154
    %v446 = vunpack.c.l.b16 %v155
    %v447 = vunpack.c.l.b16 %v156
    %v448 = vunpack.c.l.b16 %v157
    %v449 = vunpack.c.l.b16 %v158
    %v450 = vunpack.c.l.b16 %v159
    %v451 = vunpack.c.l.b16 %v160
    %v452 = vunpack.c.l.b16 %v161
    %v453 = vunpack.c.l.b16 %v162
    %v454 = vunpack.c.l.b16 %v163
    %v455 = vunpack.c.l.b16 %v164
    %v456 = vunpack.c.l.b16 %v165
    %v457 = vunpack.c.l.b16 %v166
    %v458 = vunpack.c.l.b16 %v167
    %v459 = vunpack.c.l.b16 %v168
    %v460 = vunpack.c.l.b16 %v169
    %v461 = vunpack.c.l.b16 %v170
    %v462 = vunpack.c.l.b16 %v171
    %v463 = vunpack.c.l.b16 %v172
    %v464 = vpack.c.b16 %v337, %v336
    %v465 = vpack.c.b16 %v339, %v338
    %v466 = vpack.c.b16 %v341, %v340
    %v467 = vpack.c.b16 %v343, %v342
    %v468 = vpack.c.b16 %v345, %v344
    %v469 = vpack.c.b16 %v347, %v346
    %v470 = vpack.c.b16 %v349, %v348
    %v471 = vpack.c.b16 %v351, %v350
    %v472 = vpack.c.b16 %v353, %v352
    %v473 = vpack.c.b16 %v355, %v354
    %v474 = vpack.c.b16 %v357, %v356
    %v475 = vpack.c.b16 %v359, %v358
    %v476 = vpack.c.b16 %v361, %v360
    %v477 = vpack.c.b16 %v363, %v362
    %v478 = vpack.c.b16 %v365, %v364
    %v479 = vpack.c.b16 %v367, %v366
    %v480 = vpack.c.b16 %v369, %v368
    %v481 = vpack.c.b16 %v371, %v370
    %v482 = vpack.c.b16 %v373, %v372
    %v483 = vpack.c.b16 %v375, %v374
    %v484 = vpack.c.b16 %v377, %v376
    %v485 = vpack.c.b16 %v379, %v378
    %v486 = vpack.c.b16 %v381, %v380
    %v487 = vpack.c.b16 %v383, %v382
    %v488 = vpack.c.b16 %v385, %v384
    %v489 = vpack.c.b16 %v387, %v386
    %v490 = vpack.c.b16 %v389, %v388
    %v491 = vpack.c.b16 %v391, %v390
    %v492 = vpack.c.b16 %v393, %v392
    %v493 = vpack.c.b16 %v395, %v394
    %v494 = vpack.c.b16 %v397, %v396
    %v495 = vpack.c.b16 %v399, %v398
    %v496 = vpack.c.b16 %v401, %v400
    %v497 = vpack.c.b16 %v403, %v402
    %v498 = vpack.c.b16 %v405, %v404
    %v499 = vpack.c.b16 %v407, %v406
    %v500 = vpack.c.b16 %v409, %v408
    %v501 = vpack.c.b16 %v411, %v410
    %v502 = vpack.c.b16 %v413, %v412
    %v503 = vpack.c.b16 %v415, %v414
    %v504 = vpack.c.b16 %v417, %v416
    %v505 = vpack.c.b16 %v419, %v418
    %v506 = vpack.c.b16 %v421, %v420
    %v507 = vpack.c.b16 %v423, %v422
    %v508 = vpack.c.b16 %v425, %v424
    %v509 = vpack.c.b16 %v427, %v426
    %v510 = vpack.c.b16 %v429, %v428
    %v511 = vpack.c.b16 %v431, %v430
    %v512 = vpack.c.b16 %v433, %v432
    %v513 = vpack.c.b16 %v435, %v434
    %v514 = vpack.c.b16 %v437, %v436
    %v515 = vpack.c.b16 %v439, %v438
    %v516 = vpack.c.b16 %v441, %v440
    %v517 = vpack.c.b16 %v443, %v442
    %v518 = vpack.c.b16 %v445, %v444
    %v519 = vpack.c.b16 %v447, %v446
    %v520 = vpack.c.b16 %v449, %v448
    %v521 = vpack.c.b16 %v451, %v450
    %v522 = vpack.c.b16 %v453, %v452
    %v523 = vpack.c.b16 %v455, %v454
    %v524 = vpack.c.b16 %v457, %v456
    %v525 = vpack.c.b16 %v459, %v458
    %v526 = vpack.c.b16 %v461, %v460
    %v527 = vpack.c.b16 %v463, %v462
    %592 = vmatprep.subr.bf16.mxu0 0
    %593 = vmatpush1.bf16.msra.mxu0 %v471
    %594 = vmatprep.subr.bf16.mxu0 0
    %595 = vmatpush1.bf16.msra.mxu0 %v470
    %596 = vmatprep.subr.bf16.mxu0 0
    %597 = vmatpush1.bf16.msra.mxu0 %v469
    %598 = vmatprep.subr.bf16.mxu0 0
    %599 = vmatpush1.bf16.msra.mxu0 %v468
    %600 = vmatprep.subr.bf16.mxu0 0
    %601 = vmatpush1.bf16.msra.mxu0 %v467
    %602 = vmatprep.subr.bf16.mxu0 0
    %603 = vmatpush1.bf16.msra.mxu0 %v466
    %604 = vmatprep.subr.bf16.mxu0 0
    %605 = vmatpush1.bf16.msra.mxu0 %v465
    %606 = vmatprep.subr.bf16.mxu0 0
    %607 = vmatpush1.bf16.msra.mxu0 %v464
    %608 = vmatprep.subr.bf16.mxu0 0
    %609 = vmatpush2.bf16.msra.mxu0 %v479
    %610 = vmatprep.subr.bf16.mxu0 0
    %611 = vmatpush2.bf16.msra.mxu0 %v478
    %612 = vmatprep.subr.bf16.mxu0 0
    %613 = vmatpush2.bf16.msra.mxu0 %v477
    %614 = vmatprep.subr.bf16.mxu0 0
    %615 = vmatpush2.bf16.msra.mxu0 %v476
    %616 = vmatprep.subr.bf16.mxu0 0
    %617 = vmatpush2.bf16.msra.mxu0 %v475
    %618 = vmatprep.subr.bf16.mxu0 0
    %619 = vmatpush2.bf16.msra.mxu0 %v474
    %620 = vmatprep.subr.bf16.mxu0 0
    %621 = vmatpush2.bf16.msra.mxu0 %v473
    %622 = vmatprep.subr.bf16.mxu0 0
    %623 = vmatpush2.bf16.msra.mxu0 %v472
    %624 = vmatprep.mubr.bf16.mxu0 %v193
    %625 = vmatmul.mubr.bf16.gmra.mxu0 %v192
    %v626 = vpop.f32.mrf.mxu0
    %v627 = vadd.f32 %v178, %v626
    %v628 = vpop.f32.mrf.mxu0
    %v629 = vpop.f32.mrf.mxu0
    %v630 = vpop.f32.mrf.mxu0
    %631 = vdwg.mxu0
    %632 = vmatprep.subr.bf16.mxu0 0
    %633 = vmatpush1.bf16.msra.mxu0 %v487
    %634 = vmatprep.subr.bf16.mxu0 0
    %635 = vmatpush1.bf16.msra.mxu0 %v486
    %636 = vmatprep.subr.bf16.mxu0 0
    %637 = vmatpush1.bf16.msra.mxu0 %v485
    %638 = vmatprep.subr.bf16.mxu0 0
    %639 = vmatpush1.bf16.msra.mxu0 %v484
    %640 = vmatprep.subr.bf16.mxu0 0
    %641 = vmatpush1.bf16.msra.mxu0 %v483
    %642 = vmatprep.subr.bf16.mxu0 0
    %643 = vmatpush1.bf16.msra.mxu0 %v482
    %644 = vmatprep.subr.bf16.mxu0 0
    %645 = vmatpush1.bf16.msra.mxu0 %v481
    %646 = vmatprep.subr.bf16.mxu0 0
    %647 = vmatpush1.bf16.msra.mxu0 %v480
    %648 = vmatprep.subr.bf16.mxu0 0
    %649 = vmatpush2.bf16.msra.mxu0 %v495
    %650 = vmatprep.subr.bf16.mxu0 0
    %651 = vmatpush2.bf16.msra.mxu0 %v494
    %652 = vmatprep.subr.bf16.mxu0 0
    %653 = vmatpush2.bf16.msra.mxu0 %v493
    %654 = vmatprep.subr.bf16.mxu0 0
    %655 = vmatpush2.bf16.msra.mxu0 %v492
    %656 = vmatprep.subr.bf16.mxu0 0
    %657 = vmatpush2.bf16.msra.mxu0 %v491
    %658 = vmatprep.subr.bf16.mxu0 0
    %659 = vmatpush2.bf16.msra.mxu0 %v490
    %660 = vmatprep.subr.bf16.mxu0 0
    %661 = vmatpush2.bf16.msra.mxu0 %v489
    %662 = vmatprep.subr.bf16.mxu0 0
    %663 = vmatpush2.bf16.msra.mxu0 %v488
    %664 = vmatprep.mubr.bf16.mxu0 %v195
    %665 = vmatmul.mubr.bf16.gmra.mxu0 %v194
    %v666 = vpop.f32.mrf.mxu0
    %v667 = vadd.f32 %v627, %v666
    %v668 = vpop.f32.mrf.mxu0
    %v669 = vpop.f32.mrf.mxu0
    %v670 = vpop.f32.mrf.mxu0
    %671 = vdwg.mxu0
    %672 = vmatprep.subr.bf16.mxu0 0
    %673 = vmatpush1.bf16.msra.mxu0 %v503
    %674 = vmatprep.subr.bf16.mxu0 0
    %675 = vmatpush1.bf16.msra.mxu0 %v502
    %676 = vmatprep.subr.bf16.mxu0 0
    %677 = vmatpush1.bf16.msra.mxu0 %v501
    %678 = vmatprep.subr.bf16.mxu0 0
    %679 = vmatpush1.bf16.msra.mxu0 %v500
    %680 = vmatprep.subr.bf16.mxu0 0
    %681 = vmatpush1.bf16.msra.mxu0 %v499
    %682 = vmatprep.subr.bf16.mxu0 0
    %683 = vmatpush1.bf16.msra.mxu0 %v498
    %684 = vmatprep.subr.bf16.mxu0 0
    %685 = vmatpush1.bf16.msra.mxu0 %v497
    %686 = vmatprep.subr.bf16.mxu0 0
    %687 = vmatpush1.bf16.msra.mxu0 %v496
    %688 = vmatprep.subr.bf16.mxu0 0
    %689 = vmatpush2.bf16.msra.mxu0 %v511
    %690 = vmatprep.subr.bf16.mxu0 0
    %691 = vmatpush2.bf16.msra.mxu0 %v510
    %692 = vmatprep.subr.bf16.mxu0 0
    %693 = vmatpush2.bf16.msra.mxu0 %v509
    %694 = vmatprep.subr.bf16.mxu0 0
    %695 = vmatpush2.bf16.msra.mxu0 %v508
    %696 = vmatprep.subr.bf16.mxu0 0
    %697 = vmatpush2.bf16.msra.mxu0 %v507
    %698 = vmatprep.subr.bf16.mxu0 0
    %699 = vmatpush2.bf16.msra.mxu0 %v506
    %700 = vmatprep.subr.bf16.mxu0 0
    %701 = vmatpush2.bf16.msra.mxu0 %v505
    %702 = vmatprep.subr.bf16.mxu0 0
    %703 = vmatpush2.bf16.msra.mxu0 %v504
    %704 = vmatprep.mubr.bf16.mxu0 %v197
    %705 = vmatmul.mubr.bf16.gmra.mxu0 %v196
    %v706 = vpop.f32.mrf.mxu0
    %v707 = vadd.f32 %v667, %v706
    %v708 = vpop.f32.mrf.mxu0
    %v709 = vpop.f32.mrf.mxu0
    %v710 = vpop.f32.mrf.mxu0
    %711 = vdwg.mxu0
    %712 = vmatprep.subr.bf16.mxu0 0
    %713 = vmatpush1.bf16.msra.mxu0 %v519
    %714 = vmatprep.subr.bf16.mxu0 0
    %715 = vmatpush1.bf16.msra.mxu0 %v518
    %716 = vmatprep.subr.bf16.mxu0 0
    %717 = vmatpush1.bf16.msra.mxu0 %v517
    %718 = vmatprep.subr.bf16.mxu0 0
    %719 = vmatpush1.bf16.msra.mxu0 %v516
    %720 = vmatprep.subr.bf16.mxu0 0
    %721 = vmatpush1.bf16.msra.mxu0 %v515
    %722 = vmatprep.subr.bf16.mxu0 0
    %723 = vmatpush1.bf16.msra.mxu0 %v514
    %724 = vmatprep.subr.bf16.mxu0 0
    %725 = vmatpush1.bf16.msra.mxu0 %v513
    %726 = vmatprep.subr.bf16.mxu0 0
    %727 = vmatpush1.bf16.msra.mxu0 %v512
    %728 = vmatprep.subr.bf16.mxu0 0
    %729 = vmatpush2.bf16.msra.mxu0 %v527
    %730 = vmatprep.subr.bf16.mxu0 0
    %731 = vmatpush2.bf16.msra.mxu0 %v526
    %732 = vmatprep.subr.bf16.mxu0 0
    %733 = vmatpush2.bf16.msra.mxu0 %v525
    %734 = vmatprep.subr.bf16.mxu0 0
    %735 = vmatpush2.bf16.msra.mxu0 %v524
    %736 = vmatprep.subr.bf16.mxu0 0
    %737 = vmatpush2.bf16.msra.mxu0 %v523
    %738 = vmatprep.subr.bf16.mxu0 0
    %739 = vmatpush2.bf16.msra.mxu0 %v522
    %740 = vmatprep.subr.bf16.mxu0 0
    %741 = vmatpush2.bf16.msra.mxu0 %v521
    %742 = vmatprep.subr.bf16.mxu0 0
    %743 = vmatpush2.bf16.msra.mxu0 %v520
    %744 = vmatprep.mubr.bf16.mxu0 %v199
    %745 = vmatmul.mubr.bf16.gmra.mxu0 %v198
    %v746 = vpop.f32.mrf.mxu0
    %v747 = vadd.f32 %v707, %v746
    %v748 = vpop.f32.mrf.mxu0
    %v749 = vpop.f32.mrf.mxu0
    %v750 = vpop.f32.mrf.mxu0
    %751 = vdwg.mxu0
    %v752 = vmax.f32 %v747, 0.0
    %v753 = vpack.c.bf16 %v752, %v752
    %v754 = vld [vmem:[%s3] sm:$0xf]
    %v755 = vld [vmem:[%s3 + $0x4] sm:$0xf]
    %v756 = vld [vmem:[%s3 + $0x8] sm:$0xf]
    %v757 = vld [vmem:[%s3 + $0xc] sm:$0xf]
    %v758 = vld [vmem:[%s3 + $0x10] sm:$0xf]
    %v759 = vld [vmem:[%s3 + $0x14] sm:$0xf]
    %v760 = vld [vmem:[%s3 + $0x18] sm:$0xf]
    %v761 = vld [vmem:[%s3 + $0x1c] sm:$0xf]
    %v762 = vld [vmem:[%s3 + $0x20] sm:$0xf]
    %v763 = vld [vmem:[%s3 + $0x24] sm:$0xf]
    %v764 = vld [vmem:[%s3 + $0x28] sm:$0xf]
    %v765 = vld [vmem:[%s3 + $0x2c] sm:$0xf]
    %v766 = vld [vmem:[%s3 + $0x30] sm:$0xf]
    %v767 = vld [vmem:[%s3 + $0x34] sm:$0xf]
    %v768 = vld [vmem:[%s3 + $0x38] sm:$0xf]
    %v769 = vld [vmem:[%s3 + $0x3c] sm:$0xf]
    %v770 = vld [vmem:[%s4] sm:$0x1]
    %v772 = vlaneseq
    %v773 = vshrl.u32 %v772, 7
    %v774 = vsub.s32 0, %v773
    %v775 = vrot.slane %v770, %v774
    %v793 = vunpack.c.l.b16 %v754
    %v794 = vunpack.c.l.b16 %v755
    %v795 = vunpack.c.l.b16 %v756
    %v796 = vunpack.c.l.b16 %v757
    %v797 = vunpack.c.l.b16 %v758
    %v798 = vunpack.c.l.b16 %v759
    %v799 = vunpack.c.l.b16 %v760
    %v800 = vunpack.c.l.b16 %v761
    %v801 = vunpack.c.l.b16 %v762
    %v802 = vunpack.c.l.b16 %v763
    %v803 = vunpack.c.l.b16 %v764
    %v804 = vunpack.c.l.b16 %v765
    %v805 = vunpack.c.l.b16 %v766
    %v806 = vunpack.c.l.b16 %v767
    %v807 = vunpack.c.l.b16 %v768
    %v808 = vunpack.c.l.b16 %v769
    %v809 = vpack.c.b16 %v794, %v793
    %v810 = vpack.c.b16 %v796, %v795
    %v811 = vpack.c.b16 %v798, %v797
    %v812 = vpack.c.b16 %v800, %v799
    %v813 = vpack.c.b16 %v802, %v801
    %v814 = vpack.c.b16 %v804, %v803
    %v815 = vpack.c.b16 %v806, %v805
    %v816 = vpack.c.b16 %v808, %v807
    %825 = vmatprep.subr.bf16.mxu0 0
    %826 = vmatpush1.bf16.msra.mxu0 %v816
    %827 = vmatprep.subr.bf16.mxu0 0
    %828 = vmatpush1.bf16.msra.mxu0 %v815
    %829 = vmatprep.subr.bf16.mxu0 0
    %830 = vmatpush1.bf16.msra.mxu0 %v814
    %831 = vmatprep.subr.bf16.mxu0 0
    %832 = vmatpush1.bf16.msra.mxu0 %v813
    %833 = vmatprep.subr.bf16.mxu0 0
    %834 = vmatpush1.bf16.msra.mxu0 %v812
    %835 = vmatprep.subr.bf16.mxu0 0
    %836 = vmatpush1.bf16.msra.mxu0 %v811
    %837 = vmatprep.subr.bf16.mxu0 0
    %838 = vmatpush1.bf16.msra.mxu0 %v810
    %839 = vmatprep.subr.bf16.mxu0 0
    %840 = vmatpush1.bf16.msra.mxu0 %v809
    %841 = vmatprep.subr.bf16.mxu0 0
    %842 = vmatpush2.bf16.msra.mxu0 0
    %843 = vmatprep.subr.bf16.mxu0 0
    %844 = vmatpush2.bf16.msra.mxu0 0
    %845 = vmatprep.subr.bf16.mxu0 0
    %846 = vmatpush2.bf16.msra.mxu0 0
    %847 = vmatprep.subr.bf16.mxu0 0
    %848 = vmatpush2.bf16.msra.mxu0 0
    %849 = vmatprep.subr.bf16.mxu0 0
    %850 = vmatpush2.bf16.msra.mxu0 0
    %851 = vmatprep.subr.bf16.mxu0 0
    %852 = vmatpush2.bf16.msra.mxu0 0
    %853 = vmatprep.subr.bf16.mxu0 0
    %854 = vmatpush2.bf16.msra.mxu0 0
    %855 = vmatprep.subr.bf16.mxu0 0
    %856 = vmatpush2.bf16.msra.mxu0 0
    %857 = vmatprep.mubr.bf16.mxu0 0
    %858 = vmatmul.mubr.bf16.gmra.mxu0 %v753
    %v859 = vpop.f32.mrf.mxu0
    %v860 = vadd.f32 %v775, %v859
    %v861 = vpop.f32.mrf.mxu0
    %v862 = vpop.f32.mrf.mxu0
    %v863 = vpop.f32.mrf.mxu0
    %864 = vdwg.mxu0
    %v865 = vmax.f32 %v860, 0.0
    %v866 = vpack.c.bf16 %v865, %v865
    %v867 = vld [vmem:[%s5] sm:$0xf]
    %v868 = vld [vmem:[%s5 + $0x4] sm:$0xf]
    %v869 = vld [vmem:[%s5 + $0x8] sm:$0xf]
    %v870 = vld [vmem:[%s5 + $0xc] sm:$0xf]
    %v871 = vld [vmem:[%s5 + $0x10] sm:$0xf]
    %v872 = vld [vmem:[%s5 + $0x14] sm:$0xf]
    %v873 = vld [vmem:[%s5 + $0x18] sm:$0xf]
    %v874 = vld [vmem:[%s5 + $0x1c] sm:$0xf]
    %v875 = vld [vmem:[%s5 + $0x20] sm:$0xf]
    %v876 = vld [vmem:[%s5 + $0x24] sm:$0xf]
    %v877 = vld [vmem:[%s5 + $0x28] sm:$0xf]
    %v878 = vld [vmem:[%s5 + $0x2c] sm:$0xf]
    %v879 = vld [vmem:[%s5 + $0x30] sm:$0xf]
    %v880 = vld [vmem:[%s5 + $0x34] sm:$0xf]
    %v881 = vld [vmem:[%s5 + $0x38] sm:$0xf]
    %v882 = vld [vmem:[%s5 + $0x3c] sm:$0xf]
    %v883 = vld [vmem:[%s6] sm:$0x1]
    %v885 = vlaneseq
    %v886 = vshrl.u32 %v885, 7
    %v887 = vsub.s32 0, %v886
    %v888 = vrot.slane %v883, %v887
    %v906 = vunpack.c.l.b16 %v867
    %v907 = vunpack.c.l.b16 %v868
    %v908 = vunpack.c.l.b16 %v869
    %v909 = vunpack.c.l.b16 %v870
    %v910 = vunpack.c.l.b16 %v871
    %v911 = vunpack.c.l.b16 %v872
    %v912 = vunpack.c.l.b16 %v873
    %v913 = vunpack.c.l.b16 %v874
    %v914 = vunpack.c.l.b16 %v875
    %v915 = vunpack.c.l.b16 %v876
    %v916 = vunpack.c.l.b16 %v877
    %v917 = vunpack.c.l.b16 %v878
    %v918 = vunpack.c.l.b16 %v879
    %v919 = vunpack.c.l.b16 %v880
    %v920 = vunpack.c.l.b16 %v881
    %v921 = vunpack.c.l.b16 %v882
    %v922 = vpack.c.b16 %v907, %v906
    %v923 = vpack.c.b16 %v909, %v908
    %v924 = vpack.c.b16 %v911, %v910
    %v925 = vpack.c.b16 %v913, %v912
    %v926 = vpack.c.b16 %v915, %v914
    %v927 = vpack.c.b16 %v917, %v916
    %v928 = vpack.c.b16 %v919, %v918
    %v929 = vpack.c.b16 %v921, %v920
    %938 = vmatprep.subr.bf16.mxu0 0
    %939 = vmatpush1.bf16.msra.mxu0 %v929
    %940 = vmatprep.subr.bf16.mxu0 0
    %941 = vmatpush1.bf16.msra.mxu0 %v928
    %942 = vmatprep.subr.bf16.mxu0 0
    %943 = vmatpush1.bf16.msra.mxu0 %v927
    %944 = vmatprep.subr.bf16.mxu0 0
    %945 = vmatpush1.bf16.msra.mxu0 %v926
    %946 = vmatprep.subr.bf16.mxu0 0
    %947 = vmatpush1.bf16.msra.mxu0 %v925
    %948 = vmatprep.subr.bf16.mxu0 0
    %949 = vmatpush1.bf16.msra.mxu0 %v924
    %950 = vmatprep.subr.bf16.mxu0 0
    %951 = vmatpush1.bf16.msra.mxu0 %v923
    %952 = vmatprep.subr.bf16.mxu0 0
    %953 = vmatpush1.bf16.msra.mxu0 %v922
    %954 = vmatprep.subr.bf16.mxu0 0
    %955 = vmatpush2.bf16.msra.mxu0 0
    %956 = vmatprep.subr.bf16.mxu0 0
    %957 = vmatpush2.bf16.msra.mxu0 0
    %958 = vmatprep.subr.bf16.mxu0 0
    %959 = vmatpush2.bf16.msra.mxu0 0
    %960 = vmatprep.subr.bf16.mxu0 0
    %961 = vmatpush2.bf16.msra.mxu0 0
    %962 = vmatprep.subr.bf16.mxu0 0
    %963 = vmatpush2.bf16.msra.mxu0 0
    %964 = vmatprep.subr.bf16.mxu0 0
    %965 = vmatpush2.bf16.msra.mxu0 0
    %966 = vmatprep.subr.bf16.mxu0 0
    %967 = vmatpush2.bf16.msra.mxu0 0
    %968 = vmatprep.subr.bf16.mxu0 0
    %969 = vmatpush2.bf16.msra.mxu0 0
    %970 = vmatprep.mubr.bf16.mxu0 0
    %971 = vmatmul.mubr.bf16.gmra.mxu0 %v866
    %v972 = vpop.f32.mrf.mxu0
    %v973 = vadd.f32 %v888, %v972
    %v974 = vpop.f32.mrf.mxu0
    %v975 = vpop.f32.mrf.mxu0
    %v976 = vpop.f32.mrf.mxu0
    %977 = vdwg.mxu0
    %978 = vst [vmem:[%s7] sm:$0xff] %v973
    // Predicated region
    $region34: #{_mlp_forward_impl.1} parent=1 // pred_check
      _
    $region35: #{_mlp_forward_impl.1} parent=1 // pred_check_branch
      %980 = sbr.rel (0) target = $region37
    $region36: #{_mlp_forward_impl.1} parent=1 // pred_region
      _
    $region37: #{_mlp_forward_impl.1} parent=1 // pred_fallthru
      _
    // Predicated region
    $region38: #{_mlp_forward_impl.1} parent=1 // pred_check
      _
    $region39: #{_mlp_forward_impl.1} parent=1 // pred_check_branch
      %982 = sbr.rel (0) target = $region41
    $region40: #{_mlp_forward_impl.1} parent=1 // pred_region
      _
    $region41: #{_mlp_forward_impl.1} parent=1 // pred_fallthru
      _
    %983 = vsyncpa [#allocation3], 1

</llo_original>
